<compile_context>
chip_gen: v7x
topology: tpu7x:2x2x1
jax: 0.10.0
libtpu: 0.0.40
codegen_flags: <defaults>
</compile_context>

<pallas_src>
import functools

import jax
import jax.numpy as jnp
from jax.experimental import pallas as pl
from jax.experimental.pallas import tpu as pltpu


def _kd_partial_kernel(teacher_ref, student_ref, out_ref, *, inv_temp, batch,
                       use_mxu_rowsum):
    """One (tile_rows, C) slab of rows -> one lane-dense (1, 8, 128) partial."""
    i = pl.program_id(0)
    tile_rows = teacher_ref.shape[0]
    num_classes = teacher_ref.shape[1]

    t = teacher_ref[...].astype(jnp.float32) * jnp.float32(inv_temp)
    s = student_ref[...].astype(jnp.float32) * jnp.float32(inv_temp)

    # Only the two row-maxes stay on the XLU path.
    t_shift = t - jnp.max(t, axis=-1, keepdims=True)
    s_shift = s - jnp.max(s, axis=-1, keepdims=True)

    t_exp = jnp.exp(t_shift)
    s_exp = jnp.exp(s_shift)
    weighted = t_exp * (t_shift - s_shift)

    if use_mxu_rowsum:
        # Offload the three lane sums to the (otherwise idle) MXU.
        ones = jnp.ones((num_classes, 128), jnp.float32)
        hp = jax.lax.Precision.HIGHEST      # keep the row sums f32-accurate
        t_sum = jnp.dot(t_exp, ones, precision=hp,
                        preferred_element_type=jnp.float32)[:, 0:1]
        s_sum = jnp.dot(s_exp, ones, precision=hp,
                        preferred_element_type=jnp.float32)[:, 0:1]
        inner = jnp.dot(weighted, ones, precision=hp,
                        preferred_element_type=jnp.float32)[:, 0:1]
    else:
        t_sum = jnp.sum(t_exp, axis=-1, keepdims=True)
        s_sum = jnp.sum(s_exp, axis=-1, keepdims=True)
        inner = jnp.sum(weighted, axis=-1, keepdims=True)

    # sum_c p*(log p - log q) = inner/t_sum + log(s_sum) - log(t_sum)
    kl_row = inner / t_sum + jnp.log(s_sum) - jnp.log(t_sum)   # (tile_rows, 1)

    # Mask out padded rows of a ragged last tile (select, so Inf/NaN from
    # padded garbage never reaches the sum).
    row = i * tile_rows + jax.lax.broadcasted_iota(jnp.int32, (tile_rows, 1), 0)
    kl_row = jnp.where(row < batch, kl_row, jnp.float32(0.0))

    kl_tile = jnp.sum(kl_row)                                  # scalar partial

    # Lane-dense partial slab: value at [0, 0, 0], zeros elsewhere.
    sub = jax.lax.broadcasted_iota(jnp.int32, (1, 8, 128), 1)
    lane = jax.lax.broadcasted_iota(jnp.int32, (1, 8, 128), 2)
    out_ref[...] = jnp.where((sub == 0) & (lane == 0), kl_tile, jnp.float32(0.0))


def _vmem_capacity_bytes():
    """Physical VMEM of the current chip; conservative 64 MiB if unknown."""
    try:
        return int(pltpu.get_tpu_info().vmem_capacity_bytes)
    except Exception:
        return 64 << 20          # assume the smallest (v7x) budget


def _choose_tile_rows(batch, num_classes, tile_bytes_budget):
    """Row tile: multiple of 8, within the per-tile f32 byte budget, and small
    enough that batches >= 16 always yield >= 2 grid steps (v7x megacore)."""
    rows = max(8, (tile_bytes_budget // (num_classes * 4)) // 8 * 8)
    if batch >= 16:
        rows = min(rows, max(8, (batch // 16) * 8))
    if batch <= rows:
        return batch             # single full-extent block, no padding
    return rows


def kd_loss(teacher_logits, student_logits, *, temp=4.0, param=0.5,
            reduction='mean'):
    """Pallas-backed KDLoss forward. Inputs: (B, C) logits. Returns scalar f32."""
    assert teacher_logits.shape == student_logits.shape
    B, C = teacher_logits.shape

    vmem_cap = _vmem_capacity_bytes()
    if vmem_cap >= (100 << 20):                  # v5e / v6e (128 MiB VMEM)
        tile_budget = 6 << 20
        vmem_limit = 96 << 20
    else:                                        # v7x (64 MiB VMEM)
        tile_budget = (2 << 20) + (1 << 19)      # 2.5 MiB
        vmem_limit = 44 << 20

    tile_rows = _choose_tile_rows(B, C, tile_budget)
    num_tiles = pl.cdiv(B, tile_rows)
    use_mxu_rowsum = C <= 2048                   # XLU-bound regime only

    kernel = functools.partial(_kd_partial_kernel,
                               inv_temp=1.0 / float(temp), batch=B,
                               use_mxu_rowsum=use_mxu_rowsum)

    partials = pl.pallas_call(
        kernel,
        out_shape=jax.ShapeDtypeStruct((num_tiles, 8, 128), jnp.float32),
        grid_spec=pltpu.PrefetchScalarGridSpec(
            num_scalar_prefetch=0,
            grid=(num_tiles,),
            in_specs=[
                pl.BlockSpec((tile_rows, C), lambda i: (i, 0)),
                pl.BlockSpec((tile_rows, C), lambda i: (i, 0)),
            ],
            out_specs=pl.BlockSpec((1, 8, 128), lambda i: (i, 0, 0)),
        ),
        compiler_params=pltpu.CompilerParams(
            dimension_semantics=("parallel",),   # independent tiles -> both TCs
            vmem_limit_bytes=vmem_limit,
        ),
    )(teacher_logits, student_logits)

    total = jnp.sum(partials)                    # tiny reduce over per-tile partials
    # Matches the PyTorch module exactly: 'sum' -> kl.sum();
    # anything else -> kl.sum(1).mean().
    if reduction != 'sum':
        total = total / jnp.float32(B)
    return total * jnp.float32(temp * temp) * jnp.float32(param)


def kd_loss_ref(teacher_logits, student_logits, *, temp=4.0, param=0.5,
                reduction='mean'):
    """Pure-JAX reference for validation."""
    log_q = jax.nn.log_softmax(student_logits.astype(jnp.float32) / temp, axis=-1)
    log_p = jax.nn.log_softmax(teacher_logits.astype(jnp.float32) / temp, axis=-1)
    p = jnp.exp(log_p)
    kl = p * (log_p - log_q)
    kl = jnp.sum(kl) if reduction == 'sum' else jnp.mean(jnp.sum(kl, axis=1))
    return kl * (temp ** 2) * param


if __name__ == "__main__":
    # Deterministic synthetic "config" values (cfg.MODEL.PARAM.*)
    KD_TEMP = 4.0
    KD_PARAM = 0.5
    KD_RED = 'mean'        # anything != 'sum' takes the sum(1).mean() branch

    B, C = 16, 128         # small, TPU-friendly (B, num_classes) logits
    key = jax.random.PRNGKey(0)
    k_t, k_s = jax.random.split(key)
    teacher = jax.random.normal(k_t, (B, C), dtype=jnp.float32)
    student = jax.random.normal(k_s, (B, C), dtype=jnp.float32)

    loss = kd_loss(teacher, student, temp=KD_TEMP, param=KD_PARAM,
                   reduction=KD_RED)
    loss = jax.block_until_ready(loss)

    ref = kd_loss_ref(teacher, student, temp=KD_TEMP, param=KD_PARAM,
                      reduction=KD_RED)
    assert jnp.allclose(loss, ref, rtol=1e-4, atol=1e-5), (loss, ref)

    print("KERNEL_OK")
</pallas_src>

<mosaic_0001>
module attributes {stable_mosaic.version = 11 : i64} {
  func.func @_kd_partial_kernel(%arg0: i32, %arg1: memref<8x128xf32, #tpu.memory_space<vmem>>, %arg2: memref<8x128xf32, #tpu.memory_space<vmem>>, %arg3: memref<1x8x128xf32, #tpu.memory_space<vmem>>) attributes {dimension_semantics = [#tpu.dimension_semantics<parallel>], iteration_bounds = array<i64: 2>, scalar_prefetch = 0 : i64, scratch_operands = 0 : i64, tpu.core_type = #tpu.core_type<tc>, window_params = [{transform_indices = @transform_0, window_bounds = array<i64: 8, 128>}, {transform_indices = @transform_1, window_bounds = array<i64: 8, 128>}, {transform_indices = @transform_2, window_bounds = array<i64: 1, 8, 128>}]} {
    %c0 = arith.constant 0 : index
    %c0_0 = arith.constant 0 : index
    %0 = vector.load %arg1[%c0, %c0_0] : memref<8x128xf32, #tpu.memory_space<vmem>>, vector<8x128xf32>
    %cst = arith.constant 2.500000e-01 : f32
    %1 = vector.broadcast %cst : f32 to vector<8x128xf32>
    %2 = arith.mulf %0, %1 : vector<8x128xf32>
    %c0_1 = arith.constant 0 : index
    %c0_2 = arith.constant 0 : index
    %3 = vector.load %arg2[%c0_1, %c0_2] : memref<8x128xf32, #tpu.memory_space<vmem>>, vector<8x128xf32>
    %cst_3 = arith.constant 2.500000e-01 : f32
    %4 = vector.broadcast %cst_3 : f32 to vector<8x128xf32>
    %5 = arith.mulf %3, %4 : vector<8x128xf32>
    %cst_4 = arith.constant dense<0xFF800000> : vector<8xf32>
    %6 = vector.multi_reduction <maximumf>, %2, %cst_4 [1] : vector<8x128xf32> to vector<8xf32>
    %7 = vector.shape_cast %6 : vector<8xf32> to vector<8x1xf32>
    %8 = vector.broadcast %7 : vector<8x1xf32> to vector<8x128xf32>
    %9 = arith.subf %2, %8 : vector<8x128xf32>
    %cst_5 = arith.constant dense<0xFF800000> : vector<8xf32>
    %10 = vector.multi_reduction <maximumf>, %5, %cst_5 [1] : vector<8x128xf32> to vector<8xf32>
    %11 = vector.shape_cast %10 : vector<8xf32> to vector<8x1xf32>
    %12 = vector.broadcast %11 : vector<8x1xf32> to vector<8x128xf32>
    %13 = arith.subf %5, %12 : vector<8x128xf32>
    %14 = math.exp %9 : vector<8x128xf32>
    %15 = math.exp %13 : vector<8x128xf32>
    %16 = arith.subf %9, %13 : vector<8x128xf32>
    %17 = arith.mulf %14, %16 : vector<8x128xf32>
    %cst_6 = arith.constant 1.000000e+00 : f32
    %18 = vector.broadcast %cst_6 : f32 to vector<128x128xf32>
    %cst_7 = arith.constant dense<0.000000e+00> : vector<8x128xf32>
    %19 = tpu.matmul %14, %18, %cst_7 {dimension_numbers = #tpu.dot_dimension_numbers<[1], [0], [0], [1], [0, 0, 1, 1], [], []>, precision = #tpu.contract_precision<fp32>} : vector<8x128xf32>, vector<128x128xf32>, vector<8x128xf32> -> vector<8x128xf32>
    %20 = vector.extract_strided_slice %19 {offsets = [0, 0], sizes = [8, 1], strides = [1, 1]} : vector<8x128xf32> to vector<8x1xf32>
    %cst_8 = arith.constant dense<0.000000e+00> : vector<8x128xf32>
    %21 = tpu.matmul %15, %18, %cst_8 {dimension_numbers = #tpu.dot_dimension_numbers<[1], [0], [0], [1], [0, 0, 1, 1], [], []>, precision = #tpu.contract_precision<fp32>} : vector<8x128xf32>, vector<128x128xf32>, vector<8x128xf32> -> vector<8x128xf32>
    %22 = vector.extract_strided_slice %21 {offsets = [0, 0], sizes = [8, 1], strides = [1, 1]} : vector<8x128xf32> to vector<8x1xf32>
    %cst_9 = arith.constant dense<0.000000e+00> : vector<8x128xf32>
    %23 = tpu.matmul %17, %18, %cst_9 {dimension_numbers = #tpu.dot_dimension_numbers<[1], [0], [0], [1], [0, 0, 1, 1], [], []>, precision = #tpu.contract_precision<fp32>} : vector<8x128xf32>, vector<128x128xf32>, vector<8x128xf32> -> vector<8x128xf32>
    %24 = vector.extract_strided_slice %23 {offsets = [0, 0], sizes = [8, 1], strides = [1, 1]} : vector<8x128xf32> to vector<8x1xf32>
    %25 = arith.divf %24, %20 : vector<8x1xf32>
    %26 = math.log %22 : vector<8x1xf32>
    %27 = arith.addf %25, %26 : vector<8x1xf32>
    %28 = math.log %20 : vector<8x1xf32>
    %29 = arith.subf %27, %28 : vector<8x1xf32>
    %c8_i32 = arith.constant 8 : i32
    %30 = arith.muli %arg0, %c8_i32 : i32
    %31 = tpu.iota {dimensions = array<i32: 0>} : vector<8x1xi32>
    %32 = vector.broadcast %30 : i32 to vector<8x1xi32>
    %33 = arith.addi %32, %31 : vector<8x1xi32>
    %c16_i32 = arith.constant 16 : i32
    %34 = vector.broadcast %c16_i32 : i32 to vector<8x1xi32>
    %35 = arith.cmpi slt, %33, %34 : vector<8x1xi32>
    %cst_10 = arith.constant 0.000000e+00 : f32
    %36 = vector.broadcast %cst_10 : f32 to vector<8x1xf32>
    %37 = arith.select %35, %29, %36 : vector<8x1xi1>, vector<8x1xf32>
    %38 = vector.shape_cast %37 : vector<8x1xf32> to vector<1x8x1xf32>
    %cst_11 = arith.constant dense<0.000000e+00> : vector<1xf32>
    %39 = vector.multi_reduction <add>, %38, %cst_11 [1, 2] : vector<1x8x1xf32> to vector<1xf32>
    %40 = vector.shape_cast %39 : vector<1xf32> to vector<1x1x1xf32>
    %41 = vector.extract %40[0, 0, 0] : f32 from vector<1x1x1xf32>
    %42 = tpu.iota {dimensions = array<i32: 1>} : vector<1x8x128xi32>
    %43 = tpu.iota {dimensions = array<i32: 2>} : vector<1x8x128xi32>
    %c0_i32 = arith.constant 0 : i32
    %44 = vector.broadcast %c0_i32 : i32 to vector<1x8x128xi32>
    %45 = arith.cmpi eq, %42, %44 : vector<1x8x128xi32>
    %c0_i32_12 = arith.constant 0 : i32
    %46 = vector.broadcast %c0_i32_12 : i32 to vector<1x8x128xi32>
    %47 = arith.cmpi eq, %43, %46 : vector<1x8x128xi32>
    %48 = arith.andi %45, %47 : vector<1x8x128xi1>
    %cst_13 = arith.constant 0.000000e+00 : f32
    %49 = vector.broadcast %41 : f32 to vector<1x8x128xf32>
    %50 = vector.broadcast %cst_13 : f32 to vector<1x8x128xf32>
    %51 = arith.select %48, %49, %50 : vector<1x8x128xi1>, vector<1x8x128xf32>
    %c0_14 = arith.constant 0 : index
    %c0_15 = arith.constant 0 : index
    %c0_16 = arith.constant 0 : index
    %52 = vector.load %arg3[%c0_14, %c0_15, %c0_16] : memref<1x8x128xf32, #tpu.memory_space<vmem>>, vector<1x8x128xf32>
    tpu.vector_store %arg3[%c0_14, %c0_15, %c0_16], %51 {strides = array<i32>} : memref<1x8x128xf32, #tpu.memory_space<vmem>>, vector<1x8x128xf32>,
    return
  }
  func.func @transform_0(%arg0: i32) -> (i32, i32) {
    %c0_i32 = arith.constant 0 : i32
    %c0_i32_0 = arith.constant 0 : i32
    return %arg0, %c0_i32 : i32, i32
  }
  func.func @transform_1(%arg0: i32) -> (i32, i32) {
    %c0_i32 = arith.constant 0 : i32
    %c0_i32_0 = arith.constant 0 : i32
    return %arg0, %c0_i32 : i32, i32
  }
  func.func @transform_2(%arg0: i32) -> (i32, i32, i32) {
    %c0_i32 = arith.constant 0 : i32
    %c0_i32_0 = arith.constant 0 : i32
    %c0_i32_1 = arith.constant 0 : i32
    return %arg0, %c0_i32, %c0_i32_0 : i32, i32, i32
  }
}

</mosaic_0001>

<llo_original>
// kernel: tpu_custom_call.1
$region0: #{tpu_custom_call.1}
  #allocation0 [shape = 'u32[]', space=smem, size = 0x4, offset = 0x4, fixed_abs, tag = 'smem constant byte address 0x4 - core index']
  #allocation1 [shape = 'u32[144,128]{1,0:T(1,128)}', space=vmem, size = 0x12000, scoped, tag = 'internal scratch']
  %s0 = inlined_call_operand.hbm [shape: f32[16,128], index: 0, kind: input, shape index: {}]
  %s1 = inlined_call_operand.hbm [shape: f32[16,128], index: 1, kind: input, shape index: {}]
  %s2 = inlined_call_operand.hbm [shape: f32[2,8,128], index: 2, kind: output, shape index: {}]
  %s3 = sld [smem:[#allocation0]]
  $region49: #{tpu_custom_call.1} parent=0
    _
  %s5 = ssub.s32 1, %s3
  %s6 = scalar_select 0, %s5, %s3
  $region1: #{tpu_custom_call.1} parent=0
    #allocation2 [shape = 'u8[8192]{0}', space=vmem, size = 0x2000, scoped, tag = 'input window, operand 0']
    #allocation3 [shape = 's32[2]{0}', space=sflag, size = 0x8, scoped, tag = 'scoped memory for tpu_custom_call.1']
    #allocation4 [shape = 's32[2]{0}', space=sflag, size = 0x8, scoped, tag = 'scoped memory for tpu_custom_call.1']
    #allocation5 [shape = 'u8[8192]{0}', space=vmem, size = 0x2000, scoped, tag = 'input window, operand 1']
    #allocation6 [shape = 's32[2]{0}', space=sflag, size = 0x8, scoped, tag = 'scoped memory for tpu_custom_call.1']
    #allocation7 [shape = 'u8[8192]{0}', space=vmem, size = 0x2000, scoped, tag = 'output window, operand 0']
    %7 = vsyncpa [#allocation3], 0
    %s8 = scalar_lea.sflag [#allocation3], 1
    %9 = vsyncpa %s8, 0
    %10 = vsyncpa [#allocation6], 0
    %s11 = scalar_lea.sflag [#allocation6], 1
    %12 = vsyncpa %s11, 0
    %13 = vsyncpa [#allocation4], 0
    %s14 = scalar_lea.sflag [#allocation4], 1
    %15 = vsyncpa %s14, 0
    loop: start=0, step=1, limit=4
    $region2: #{tpu_custom_call.1} parent=1 // loop_pre_header
      _
    $region3: #{tpu_custom_call.1} parent=1 // loop_header
      %s17 = sphi 0, %s21
      %p18 = scmp.ge.s32.totalorder %s17, 4
      %s27 = sphi 0, %s29
      %s30 = sphi 0, %s27
      %s31 = sphi 0, %s30
      %s47 = sphi 0, %s31
      %s53 = sphi 0, %s55
      %s56 = sphi 0, %s53
      %s57 = sphi 0, %s56
      %s73 = sphi 0, %s57
      %s79 = sphi 0, %s81
      %s82 = sphi 0, %s79
      %s83 = sphi 0, %s82
      %s99 = sphi 0, %s83
    $region4: #{tpu_custom_call.1} parent=1 // loop_header_branch
      %20 = sbr.rel (%p18) target = $region8
    $region5: #{tpu_custom_call.1} parent=1 // loop_body
      %s22 = ssub.s32 %s17, 1
      %s23 = ssub.s32 %s17, 2
      %s24 = sadd.s32 %s17, 1
      %s25 = ssub.s32 %s17, %s24
      %p26 = scmp.eq.s32.totalorder %s25, 0
      %s28 = sadd.s32 %s27, 1
      %s29 = scalar_select %p26, %s27, %s28
      %p32 = pneg %p26
      %p33 = scmp.eq.s32.totalorder %s17, 1
      %p34 = por %p32, %p33
      %p35 = scmp.ne.s32.totalorder %s27, %s30
      %p36 = scmp.eq.s32.totalorder %s17, 0
      %p37 = por %p35, %p36
      %p38 = scmp.ne.s32.totalorder %s27, %s30
      %p39 = scmp.eq.s32.totalorder %s22, 1
      %p40 = por %p38, %p39
      %p41 = scmp.ne.s32.totalorder %s30, %s31
      %p42 = scmp.eq.s32.totalorder %s22, 0
      %p43 = por %p41, %p42
      %p44 = scmp.ne.s32.totalorder %s30, %s31
      %p45 = scmp.eq.s32.totalorder %s23, 1
      %p46 = por %p44, %p45
      %p48 = scmp.ne.s32.totalorder %s31, %s47
      %p49 = scmp.eq.s32.totalorder %s23, 0
      %p50 = por %p48, %p49
      %s51 = ssub.s32 %s17, %s24
      %p52 = scmp.eq.s32.totalorder %s51, 0
      %s54 = sadd.s32 %s53, 1
      %s55 = scalar_select %p52, %s53, %s54
      %p58 = pneg %p52
      %p59 = scmp.eq.s32.totalorder %s17, 1
      %p60 = por %p58, %p59
      %p61 = scmp.ne.s32.totalorder %s53, %s56
      %p62 = scmp.eq.s32.totalorder %s17, 0
      %p63 = por %p61, %p62
      %p64 = scmp.ne.s32.totalorder %s53, %s56
      %p65 = scmp.eq.s32.totalorder %s22, 1
      %p66 = por %p64, %p65
      %p67 = scmp.ne.s32.totalorder %s56, %s57
      %p68 = scmp.eq.s32.totalorder %s22, 0
      %p69 = por %p67, %p68
      %p70 = scmp.ne.s32.totalorder %s56, %s57
      %p71 = scmp.eq.s32.totalorder %s23, 1
      %p72 = por %p70, %p71
      %p74 = scmp.ne.s32.totalorder %s57, %s73
      %p75 = scmp.eq.s32.totalorder %s23, 0
      %p76 = por %p74, %p75
      %s77 = ssub.s32 %s17, %s24
      %p78 = scmp.eq.s32.totalorder %s77, 0
      %s80 = sadd.s32 %s79, 1
      %s81 = scalar_select %p78, %s79, %s80
      %p84 = pneg %p78
      %p85 = scmp.eq.s32.totalorder %s17, 1
      %p86 = por %p84, %p85
      %p87 = scmp.ne.s32.totalorder %s79, %s82
      %p88 = scmp.eq.s32.totalorder %s17, 0
      %p89 = por %p87, %p88
      %p90 = scmp.ne.s32.totalorder %s79, %s82
      %p91 = scmp.eq.s32.totalorder %s22, 1
      %p92 = por %p90, %p91
      %p93 = scmp.ne.s32.totalorder %s82, %s83
      %p94 = scmp.eq.s32.totalorder %s22, 0
      %p95 = por %p93, %p94
      %p96 = scmp.ne.s32.totalorder %s82, %s83
      %p97 = scmp.eq.s32.totalorder %s23, 1
      %p98 = por %p96, %p97
      %p100 = scmp.ne.s32.totalorder %s83, %s99
      %p101 = scmp.eq.s32.totalorder %s23, 0
      %p102 = por %p100, %p101
      %p103 = scmp.le.s32.totalorder 1, %s17
      %p104 = scmp.lt.s32.totalorder %s17, 3
      %p105 = pnand %p103, %p104
      %p106 = pneg %p105
      // Predicated region
      $region9: #{tpu_custom_call.1} parent=5 // pred_check
        _
      $region10: #{tpu_custom_call.1} parent=5 // pred_check_branch
        %108 = sbr.rel (%p105) target = $region12
      $region11: #{tpu_custom_call.1} parent=5 // pred_region
        %s109 = ssub.s32 %s17, 1
      $region12: #{tpu_custom_call.1} parent=5 // pred_fallthru
        _
      %p110 = scmp.lt.s32.totalorder %s17, 2
      // Predicated region
      $region13: #{tpu_custom_call.1} parent=5 // pred_check
        %p111 = pneg %p110
      $region14: #{tpu_custom_call.1} parent=5 // pred_check_branch
        %113 = sbr.rel (%p111) target = $region16
      $region15: #{tpu_custom_call.1} parent=5 // pred_region
        // Predicated region
        $region17: #{tpu_custom_call.1} parent=15 // pred_check
          %p114 = pneg %p37
        $region18: #{tpu_custom_call.1} parent=15 // pred_check_branch
          %116 = sbr.rel (%p114) target = $region20
        $region19: #{tpu_custom_call.1} parent=15 // pred_region
          %s117 = sand.u32 %s27, 1
          %s118 = scalar_lea.sflag [#allocation3], %s117
          %s119 = sand.u32 %s27, 1
          %s120 = smul.addr %s119, 8
          %s121 = scalar_lea.vmem [#allocation2], %s120
          %s123 = ssub.s32 128, 128
          %124 = vsyncadd %s118, %s123
          %s125 = smul.addr %s17, 128
          %s126 = scalar_lea.hbm %s0, %s125
          %s128 = sshll.u32 %s121, 4
          %s129 = int_to_ptr.vmem [resolvable:$true] %s128
          %131 = dma.hbm_to_vmem [thread:$0]  %s126, 128, %s129, %s118
        $region20: #{tpu_custom_call.1} parent=15 // pred_fallthru
          _
        // Predicated region
        $region21: #{tpu_custom_call.1} parent=15 // pred_check
          %p132 = pneg %p63
        $region22: #{tpu_custom_call.1} parent=15 // pred_check_branch
          %134 = sbr.rel (%p132) target = $region24
        $region23: #{tpu_custom_call.1} parent=15 // pred_region
          %s135 = sand.u32 %s53, 1
          %s136 = scalar_lea.sflag [#allocation6], %s135
          %s137 = sand.u32 %s53, 1
          %s138 = smul.addr %s137, 8
          %s139 = scalar_lea.vmem [#allocation5], %s138
          %s141 = ssub.s32 128, 128
          %142 = vsyncadd %s136, %s141
          %s143 = smul.addr %s17, 128
          %s144 = scalar_lea.hbm %s1, %s143
          %s146 = sshll.u32 %s139, 4
          %s147 = int_to_ptr.vmem [resolvable:$true] %s146
          %149 = dma.hbm_to_vmem [thread:$0]  %s144, 128, %s147, %s136
        $region24: #{tpu_custom_call.1} parent=15 // pred_fallthru
          _
      $region16: #{tpu_custom_call.1} parent=5 // pred_fallthru
        _
      %p150 = scmp.le.s32.totalorder 1, %s17
      %p151 = scmp.lt.s32.totalorder %s17, 3
      %p152 = pnand %p150, %p151
      %p153 = pneg %p152
      // Predicated region
      $region25: #{tpu_custom_call.1} parent=5 // pred_check
        _
      $region26: #{tpu_custom_call.1} parent=5 // pred_check_branch
        %155 = sbr.rel (%p152) target = $region28
      $region27: #{tpu_custom_call.1} parent=5 // pred_region
        %s156 = ssub.s32 %s17, 1
        %s157 = sand.u32 %s30, 1
        %s158 = scalar_lea.sflag [#allocation3], %s157
        %s159 = sand.u32 %s30, 1
        %s160 = smul.addr %s159, 8
        %s161 = scalar_lea.vmem [#allocation2], %s160
        // Predicated region
        $region29: #{tpu_custom_call.1} parent=27 // pred_check
          %p162 = pneg %p43
        $region30: #{tpu_custom_call.1} parent=27 // pred_check_branch
          %164 = sbr.rel (%p162) target = $region32
        $region31: #{tpu_custom_call.1} parent=27 // pred_region
          %165 = dma.done %s158, 128
        $region32: #{tpu_custom_call.1} parent=27 // pred_fallthru
          _
        %s166 = sand.u32 %s56, 1
        %s167 = scalar_lea.sflag [#allocation6], %s166
        %s168 = sand.u32 %s56, 1
        %s169 = smul.addr %s168, 8
        %s170 = scalar_lea.vmem [#allocation5], %s169
        // Predicated region
        $region33: #{tpu_custom_call.1} parent=27 // pred_check
          %p171 = pneg %p69
        $region34: #{tpu_custom_call.1} parent=27 // pred_check_branch
          %173 = sbr.rel (%p171) target = $region36
        $region35: #{tpu_custom_call.1} parent=27 // pred_region
          %174 = dma.done %s167, 128
        $region36: #{tpu_custom_call.1} parent=27 // pred_fallthru
          _
        %s175 = sand.u32 %s30, 1
        %s176 = scalar_lea.sflag [#allocation3], %s175
        %s177 = sand.u32 %s30, 1
        %s178 = smul.addr %s177, 8
        %s179 = scalar_lea.vmem [#allocation2], %s178
        %p180 = pneg %p43
        %p181 = pneg %p40
        %s182 = sand.u32 %s56, 1
        %s183 = scalar_lea.sflag [#allocation6], %s182
        %s184 = sand.u32 %s56, 1
        %s185 = smul.addr %s184, 8
        %s186 = scalar_lea.vmem [#allocation5], %s185
        %p187 = pneg %p69
        %p188 = pneg %p66
        %p189 = pneg %p95
        %p190 = pneg %p92
        %s191 = sand.u32 %s82, 1
        %s192 = scalar_lea.sflag [#allocation4], %s191
        %s193 = sand.u32 %s82, 1
        %s194 = smul.addr %s193, 8
        %s195 = scalar_lea.vmem [#allocation7], %s194
        %v196 = vld [vmem:[%s161] sm:$0xff]
        %v197 = vmul.f32 %v196, 0.25
        %v198 = vld [vmem:[%s170] sm:$0xff]
        %v199 = vmul.f32 %v198, 0.25
        %200 = vmax.xlane.f32.xlu0 %v197
        %v201 = vpop.xlane.xlu0 %200
        %v202 = vsub.f32 %v197, %v201
        %203 = vmax.xlane.f32.xlu0 %v199
        %v204 = vpop.xlane.xlu0 %203
        %v205 = vsub.f32 %v199, %v204
        %v206 = vmul.f32 %v202, 1.442695
        %v207 = vpow.pop %v206
        %v208 = vmul.f32 %v205, 1.442695
        %v209 = vpow.pop %v208
        %v210 = vsub.f32 %v202, %v205
        %v211 = vmul.f32 %v207, %v210
        %212 = vmatprep.subr.mxu0 0.0
        %213 = vmatpush1.msra.mxu0 1.0
        %214 = vmatprep.subr.mxu0 0.0
        %215 = vmatpush1.msra.mxu0 1.0
        %216 = vmatprep.subr.mxu0 0.0
        %217 = vmatpush1.msra.mxu0 1.0
        %218 = vmatprep.subr.mxu0 0.0
        %219 = vmatpush1.msra.mxu0 1.0
        %220 = vmatprep.subr.mxu0 0.0
        %221 = vmatpush1.msra.mxu0 1.0
        %222 = vmatprep.subr.mxu0 0.0
        %223 = vmatpush1.msra.mxu0 1.0
        %224 = vmatprep.subr.mxu0 0.0
        %225 = vmatpush1.msra.mxu0 1.0
        %226 = vmatprep.subr.mxu0 0.0
        %227 = vmatpush1.msra.mxu0 1.0
        %228 = vmatprep.subr.mxu0 0.0
        %229 = vmatpush1.msra.mxu0 1.0
        %230 = vmatprep.subr.mxu0 0.0
        %231 = vmatpush1.msra.mxu0 1.0
        %232 = vmatprep.subr.mxu0 0.0
        %233 = vmatpush1.msra.mxu0 1.0
        %234 = vmatprep.subr.mxu0 0.0
        %235 = vmatpush1.msra.mxu0 1.0
        %236 = vmatprep.subr.mxu0 0.0
        %237 = vmatpush1.msra.mxu0 1.0
        %238 = vmatprep.subr.mxu0 0.0
        %239 = vmatpush1.msra.mxu0 1.0
        %240 = vmatprep.subr.mxu0 0.0
        %241 = vmatpush1.msra.mxu0 1.0
        %242 = vmatprep.subr.mxu0 0.0
        %243 = vmatpush1.msra.mxu0 1.0
        %244 = vmatprep.subr.mxu0 0.0
        %245 = vmatpush1.msra.mxu0 0.0
        %246 = vmatprep.subr.mxu0 0.0
        %247 = vmatpush1.msra.mxu0 0.0
        %248 = vmatprep.subr.mxu0 0.0
        %249 = vmatpush1.msra.mxu0 0.0
        %250 = vmatprep.subr.mxu0 0.0
        %251 = vmatpush1.msra.mxu0 0.0
        %252 = vmatprep.subr.mxu0 0.0
        %253 = vmatpush1.msra.mxu0 0.0
        %254 = vmatprep.subr.mxu0 0.0
        %255 = vmatpush1.msra.mxu0 0.0
        %256 = vmatprep.subr.mxu0 0.0
        %257 = vmatpush1.msra.mxu0 0.0
        %258 = vmatprep.subr.mxu0 0.0
        %259 = vmatpush1.msra.mxu0 0.0
        %260 = vmatprep.subr.mxu0 0.0
        %261 = vmatpush1.msra.mxu0 0.0
        %262 = vmatprep.subr.mxu0 0.0
        %263 = vmatpush1.msra.mxu0 0.0
        %264 = vmatprep.subr.mxu0 0.0
        %265 = vmatpush1.msra.mxu0 0.0
        %266 = vmatprep.subr.mxu0 0.0
        %267 = vmatpush1.msra.mxu0 0.0
        %268 = vmatprep.subr.mxu0 0.0
        %269 = vmatpush1.msra.mxu0 0.0
        %270 = vmatprep.subr.mxu0 0.0
        %271 = vmatpush1.msra.mxu0 0.0
        %272 = vmatprep.subr.mxu0 0.0
        %273 = vmatpush1.msra.mxu0 0.0
        %274 = vmatprep.subr.mxu0 0.0
        %275 = vmatpush1.msra.mxu0 0.0
        %276 = vmatprep.mubr.f32.mxu0 0.0
        %v277 = vand.u32 %v207, 4294901760
        %v278 = vsub.f32 %v207, %v277
        %v279 = vand.u32 %v278, 4294901760
        %v280 = vsub.f32 %v278, %v279
        %v281 = vand.u32 %v280, 4294901760
        %282 = vmatmul.mubr.f32.gmra.mrb[0].mxu0 %v281
        %v283 = vpop.f32.mrb[0].mxu0
        %v284 = vadd.f32 0.0, %v283
        %v285 = vpop.f32.mrb[0].mxu0
        %286 = vdwg.mxu0
        %287 = vmatprep.subr.mxu0 0.0
        %288 = vmatpush1.msra.mxu0 0.0
        %289 = vmatprep.subr.mxu0 0.0
        %290 = vmatpush1.msra.mxu0 0.0
        %291 = vmatprep.subr.mxu0 0.0
        %292 = vmatpush1.msra.mxu0 0.0
        %293 = vmatprep.subr.mxu0 0.0
        %294 = vmatpush1.msra.mxu0 0.0
        %295 = vmatprep.subr.mxu0 0.0
        %296 = vmatpush1.msra.mxu0 0.0
        %297 = vmatprep.subr.mxu0 0.0
        %298 = vmatpush1.msra.mxu0 0.0
        %299 = vmatprep.subr.mxu0 0.0
        %300 = vmatpush1.msra.mxu0 0.0
        %301 = vmatprep.subr.mxu0 0.0
        %302 = vmatpush1.msra.mxu0 0.0
        %303 = vmatprep.subr.mxu0 0.0
        %304 = vmatpush1.msra.mxu0 0.0
        %305 = vmatprep.subr.mxu0 0.0
        %306 = vmatpush1.msra.mxu0 0.0
        %307 = vmatprep.subr.mxu0 0.0
        %308 = vmatpush1.msra.mxu0 0.0
        %309 = vmatprep.subr.mxu0 0.0
        %310 = vmatpush1.msra.mxu0 0.0
        %311 = vmatprep.subr.mxu0 0.0
        %312 = vmatpush1.msra.mxu0 0.0
        %313 = vmatprep.subr.mxu0 0.0
        %314 = vmatpush1.msra.mxu0 0.0
        %315 = vmatprep.subr.mxu0 0.0
        %316 = vmatpush1.msra.mxu0 0.0
        %317 = vmatprep.subr.mxu0 0.0
        %318 = vmatpush1.msra.mxu0 0.0
        %319 = vmatprep.subr.mxu0 0.0
        %320 = vmatpush1.msra.mxu0 0.0
        %321 = vmatprep.subr.mxu0 0.0
        %322 = vmatpush1.msra.mxu0 0.0
        %323 = vmatprep.subr.mxu0 0.0
        %324 = vmatpush1.msra.mxu0 0.0
        %325 = vmatprep.subr.mxu0 0.0
        %326 = vmatpush1.msra.mxu0 0.0
        %327 = vmatprep.subr.mxu0 0.0
        %328 = vmatpush1.msra.mxu0 0.0
        %329 = vmatprep.subr.mxu0 0.0
        %330 = vmatpush1.msra.mxu0 0.0
        %331 = vmatprep.subr.mxu0 0.0
        %332 = vmatpush1.msra.mxu0 0.0
        %333 = vmatprep.subr.mxu0 0.0
        %334 = vmatpush1.msra.mxu0 0.0
        %335 = vmatprep.subr.mxu0 0.0
        %336 = vmatpush1.msra.mxu0 0.0
        %337 = vmatprep.subr.mxu0 0.0
        %338 = vmatpush1.msra.mxu0 0.0
        %339 = vmatprep.subr.mxu0 0.0
        %340 = vmatpush1.msra.mxu0 0.0
        %341 = vmatprep.subr.mxu0 0.0
        %342 = vmatpush1.msra.mxu0 0.0
        %343 = vmatprep.subr.mxu0 0.0
        %344 = vmatpush1.msra.mxu0 0.0
        %345 = vmatprep.subr.mxu0 0.0
        %346 = vmatpush1.msra.mxu0 0.0
        %347 = vmatprep.subr.mxu0 0.0
        %348 = vmatpush1.msra.mxu0 0.0
        %349 = vmatprep.subr.mxu0 0.0
        %350 = vmatpush1.msra.mxu0 0.0
        %351 = vmatprep.mubr.f32.mxu0 0.0
        %v352 = vand.u32 %v207, 4294901760
        %353 = vmatmul.mubr.f32.gmra.mrb[0].mxu0 %v352
        %v354 = vpop.f32.mrb[0].mxu0
        %v355 = vadd.f32 %v284, %v354
        %v356 = vpop.f32.mrb[0].mxu0
        %357 = vdwg.mxu0
        %358 = vmatprep.subr.mxu0 0.0
        %359 = vmatpush1.msra.mxu0 0.0
        %360 = vmatprep.subr.mxu0 0.0
        %361 = vmatpush1.msra.mxu0 0.0
        %362 = vmatprep.subr.mxu0 0.0
        %363 = vmatpush1.msra.mxu0 0.0
        %364 = vmatprep.subr.mxu0 0.0
        %365 = vmatpush1.msra.mxu0 0.0
        %366 = vmatprep.subr.mxu0 0.0
        %367 = vmatpush1.msra.mxu0 0.0
        %368 = vmatprep.subr.mxu0 0.0
        %369 = vmatpush1.msra.mxu0 0.0
        %370 = vmatprep.subr.mxu0 0.0
        %371 = vmatpush1.msra.mxu0 0.0
        %372 = vmatprep.subr.mxu0 0.0
        %373 = vmatpush1.msra.mxu0 0.0
        %374 = vmatprep.subr.mxu0 0.0
        %375 = vmatpush1.msra.mxu0 0.0
        %376 = vmatprep.subr.mxu0 0.0
        %377 = vmatpush1.msra.mxu0 0.0
        %378 = vmatprep.subr.mxu0 0.0
        %379 = vmatpush1.msra.mxu0 0.0
        %380 = vmatprep.subr.mxu0 0.0
        %381 = vmatpush1.msra.mxu0 0.0
        %382 = vmatprep.subr.mxu0 0.0
        %383 = vmatpush1.msra.mxu0 0.0
        %384 = vmatprep.subr.mxu0 0.0
        %385 = vmatpush1.msra.mxu0 0.0
        %386 = vmatprep.subr.mxu0 0.0
        %387 = vmatpush1.msra.mxu0 0.0
        %388 = vmatprep.subr.mxu0 0.0
        %389 = vmatpush1.msra.mxu0 0.0
        %390 = vmatprep.subr.mxu0 0.0
        %391 = vmatpush1.msra.mxu0 0.0
        %392 = vmatprep.subr.mxu0 0.0
        %393 = vmatpush1.msra.mxu0 0.0
        %394 = vmatprep.subr.mxu0 0.0
        %395 = vmatpush1.msra.mxu0 0.0
        %396 = vmatprep.subr.mxu0 0.0
        %397 = vmatpush1.msra.mxu0 0.0
        %398 = vmatprep.subr.mxu0 0.0
        %399 = vmatpush1.msra.mxu0 0.0
        %400 = vmatprep.subr.mxu0 0.0
        %401 = vmatpush1.msra.mxu0 0.0
        %402 = vmatprep.subr.mxu0 0.0
        %403 = vmatpush1.msra.mxu0 0.0
        %404 = vmatprep.subr.mxu0 0.0
        %405 = vmatpush1.msra.mxu0 0.0
        %406 = vmatprep.subr.mxu0 0.0
        %407 = vmatpush1.msra.mxu0 0.0
        %408 = vmatprep.subr.mxu0 0.0
        %409 = vmatpush1.msra.mxu0 0.0
        %410 = vmatprep.subr.mxu0 0.0
        %411 = vmatpush1.msra.mxu0 0.0
        %412 = vmatprep.subr.mxu0 0.0
        %413 = vmatpush1.msra.mxu0 0.0
        %414 = vmatprep.subr.mxu0 0.0
        %415 = vmatpush1.msra.mxu0 0.0
        %416 = vmatprep.subr.mxu0 0.0
        %417 = vmatpush1.msra.mxu0 0.0
        %418 = vmatprep.subr.mxu0 0.0
        %419 = vmatpush1.msra.mxu0 0.0
        %420 = vmatprep.subr.mxu0 0.0
        %421 = vmatpush1.msra.mxu0 0.0
        %422 = vmatprep.mubr.f32.mxu0 0.0
        %v423 = vand.u32 %v207, 4294901760
        %v424 = vsub.f32 %v207, %v423
        %425 = vmatmul.mubr.f32.gmra.mrb[0].mxu0 %v424
        %v426 = vpop.f32.mrb[0].mxu0
        %v427 = vadd.f32 %v355, %v426
        %v428 = vpop.f32.mrb[0].mxu0
        %429 = vdwg.mxu0
        %430 = vmatprep.subr.mxu0 0.0
        %431 = vmatpush1.msra.mxu0 1.0
        %432 = vmatprep.subr.mxu0 0.0
        %433 = vmatpush1.msra.mxu0 1.0
        %434 = vmatprep.subr.mxu0 0.0
        %435 = vmatpush1.msra.mxu0 1.0
        %436 = vmatprep.subr.mxu0 0.0
        %437 = vmatpush1.msra.mxu0 1.0
        %438 = vmatprep.subr.mxu0 0.0
        %439 = vmatpush1.msra.mxu0 1.0
        %440 = vmatprep.subr.mxu0 0.0
        %441 = vmatpush1.msra.mxu0 1.0
        %442 = vmatprep.subr.mxu0 0.0
        %443 = vmatpush1.msra.mxu0 1.0
        %444 = vmatprep.subr.mxu0 0.0
        %445 = vmatpush1.msra.mxu0 1.0
        %446 = vmatprep.subr.mxu0 0.0
        %447 = vmatpush1.msra.mxu0 1.0
        %448 = vmatprep.subr.mxu0 0.0
        %449 = vmatpush1.msra.mxu0 1.0
        %450 = vmatprep.subr.mxu0 0.0
        %451 = vmatpush1.msra.mxu0 1.0
        %452 = vmatprep.subr.mxu0 0.0
        %453 = vmatpush1.msra.mxu0 1.0
        %454 = vmatprep.subr.mxu0 0.0
        %455 = vmatpush1.msra.mxu0 1.0
        %456 = vmatprep.subr.mxu0 0.0
        %457 = vmatpush1.msra.mxu0 1.0
        %458 = vmatprep.subr.mxu0 0.0
        %459 = vmatpush1.msra.mxu0 1.0
        %460 = vmatprep.subr.mxu0 0.0
        %461 = vmatpush1.msra.mxu0 1.0
        %462 = vmatprep.subr.mxu0 0.0
        %463 = vmatpush1.msra.mxu0 0.0
        %464 = vmatprep.subr.mxu0 0.0
        %465 = vmatpush1.msra.mxu0 0.0
        %466 = vmatprep.subr.mxu0 0.0
        %467 = vmatpush1.msra.mxu0 0.0
        %468 = vmatprep.subr.mxu0 0.0
        %469 = vmatpush1.msra.mxu0 0.0
        %470 = vmatprep.subr.mxu0 0.0
        %471 = vmatpush1.msra.mxu0 0.0
        %472 = vmatprep.subr.mxu0 0.0
        %473 = vmatpush1.msra.mxu0 0.0
        %474 = vmatprep.subr.mxu0 0.0
        %475 = vmatpush1.msra.mxu0 0.0
        %476 = vmatprep.subr.mxu0 0.0
        %477 = vmatpush1.msra.mxu0 0.0
        %478 = vmatprep.subr.mxu0 0.0
        %479 = vmatpush1.msra.mxu0 0.0
        %480 = vmatprep.subr.mxu0 0.0
        %481 = vmatpush1.msra.mxu0 0.0
        %482 = vmatprep.subr.mxu0 0.0
        %483 = vmatpush1.msra.mxu0 0.0
        %484 = vmatprep.subr.mxu0 0.0
        %485 = vmatpush1.msra.mxu0 0.0
        %486 = vmatprep.subr.mxu0 0.0
        %487 = vmatpush1.msra.mxu0 0.0
        %488 = vmatprep.subr.mxu0 0.0
        %489 = vmatpush1.msra.mxu0 0.0
        %490 = vmatprep.subr.mxu0 0.0
        %491 = vmatpush1.msra.mxu0 0.0
        %492 = vmatprep.subr.mxu0 0.0
        %493 = vmatpush1.msra.mxu0 0.0
        %494 = vmatprep.mubr.f32.mxu0 0.0
        %v495 = vand.u32 %v207, 4294901760
        %v496 = vsub.f32 %v207, %v495
        %v497 = vand.u32 %v496, 4294901760
        %498 = vmatmul.mubr.f32.gmra.mrb[0].mxu0 %v497
        %v499 = vpop.f32.mrb[0].mxu0
        %v500 = vadd.f32 %v427, %v499
        %v501 = vpop.f32.mrb[0].mxu0
        %502 = vdwg.mxu0
        %503 = vmatprep.subr.mxu0 0.0
        %504 = vmatpush1.msra.mxu0 0.0
        %505 = vmatprep.subr.mxu0 0.0
        %506 = vmatpush1.msra.mxu0 0.0
        %507 = vmatprep.subr.mxu0 0.0
        %508 = vmatpush1.msra.mxu0 0.0
        %509 = vmatprep.subr.mxu0 0.0
        %510 = vmatpush1.msra.mxu0 0.0
        %511 = vmatprep.subr.mxu0 0.0
        %512 = vmatpush1.msra.mxu0 0.0
        %513 = vmatprep.subr.mxu0 0.0
        %514 = vmatpush1.msra.mxu0 0.0
        %515 = vmatprep.subr.mxu0 0.0
        %516 = vmatpush1.msra.mxu0 0.0
        %517 = vmatprep.subr.mxu0 0.0
        %518 = vmatpush1.msra.mxu0 0.0
        %519 = vmatprep.subr.mxu0 0.0
        %520 = vmatpush1.msra.mxu0 0.0
        %521 = vmatprep.subr.mxu0 0.0
        %522 = vmatpush1.msra.mxu0 0.0
        %523 = vmatprep.subr.mxu0 0.0
        %524 = vmatpush1.msra.mxu0 0.0
        %525 = vmatprep.subr.mxu0 0.0
        %526 = vmatpush1.msra.mxu0 0.0
        %527 = vmatprep.subr.mxu0 0.0
        %528 = vmatpush1.msra.mxu0 0.0
        %529 = vmatprep.subr.mxu0 0.0
        %530 = vmatpush1.msra.mxu0 0.0
        %531 = vmatprep.subr.mxu0 0.0
        %532 = vmatpush1.msra.mxu0 0.0
        %533 = vmatprep.subr.mxu0 0.0
        %534 = vmatpush1.msra.mxu0 0.0
        %535 = vmatprep.subr.mxu0 0.0
        %536 = vmatpush1.msra.mxu0 0.0
        %537 = vmatprep.subr.mxu0 0.0
        %538 = vmatpush1.msra.mxu0 0.0
        %539 = vmatprep.subr.mxu0 0.0
        %540 = vmatpush1.msra.mxu0 0.0
        %541 = vmatprep.subr.mxu0 0.0
        %542 = vmatpush1.msra.mxu0 0.0
        %543 = vmatprep.subr.mxu0 0.0
        %544 = vmatpush1.msra.mxu0 0.0
        %545 = vmatprep.subr.mxu0 0.0
        %546 = vmatpush1.msra.mxu0 0.0
        %547 = vmatprep.subr.mxu0 0.0
        %548 = vmatpush1.msra.mxu0 0.0
        %549 = vmatprep.subr.mxu0 0.0
        %550 = vmatpush1.msra.mxu0 0.0
        %551 = vmatprep.subr.mxu0 0.0
        %552 = vmatpush1.msra.mxu0 0.0
        %553 = vmatprep.subr.mxu0 0.0
        %554 = vmatpush1.msra.mxu0 0.0
        %555 = vmatprep.subr.mxu0 0.0
        %556 = vmatpush1.msra.mxu0 0.0
        %557 = vmatprep.subr.mxu0 0.0
        %558 = vmatpush1.msra.mxu0 0.0
        %559 = vmatprep.subr.mxu0 0.0
        %560 = vmatpush1.msra.mxu0 0.0
        %561 = vmatprep.subr.mxu0 0.0
        %562 = vmatpush1.msra.mxu0 0.0
        %563 = vmatprep.subr.mxu0 0.0
        %564 = vmatpush1.msra.mxu0 0.0
        %565 = vmatprep.subr.mxu0 0.0
        %566 = vmatpush1.msra.mxu0 0.0
        %567 = vmatprep.mubr.f32.mxu0 0.0
        %v568 = vand.u32 %v207, 4294901760
        %569 = vmatmul.mubr.f32.gmra.mrb[0].mxu0 %v568
        %v570 = vpop.f32.mrb[0].mxu0
        %v571 = vadd.f32 %v500, %v570
        %v572 = vpop.f32.mrb[0].mxu0
        %573 = vdwg.mxu0
        %574 = vmatprep.subr.mxu0 0.0
        %575 = vmatpush1.msra.mxu0 1.0
        %576 = vmatprep.subr.mxu0 0.0
        %577 = vmatpush1.msra.mxu0 1.0
        %578 = vmatprep.subr.mxu0 0.0
        %579 = vmatpush1.msra.mxu0 1.0
        %580 = vmatprep.subr.mxu0 0.0
        %581 = vmatpush1.msra.mxu0 1.0
        %582 = vmatprep.subr.mxu0 0.0
        %583 = vmatpush1.msra.mxu0 1.0
        %584 = vmatprep.subr.mxu0 0.0
        %585 = vmatpush1.msra.mxu0 1.0
        %586 = vmatprep.subr.mxu0 0.0
        %587 = vmatpush1.msra.mxu0 1.0
        %588 = vmatprep.subr.mxu0 0.0
        %589 = vmatpush1.msra.mxu0 1.0
        %590 = vmatprep.subr.mxu0 0.0
        %591 = vmatpush1.msra.mxu0 1.0
        %592 = vmatprep.subr.mxu0 0.0
        %593 = vmatpush1.msra.mxu0 1.0
        %594 = vmatprep.subr.mxu0 0.0
        %595 = vmatpush1.msra.mxu0 1.0
        %596 = vmatprep.subr.mxu0 0.0
        %597 = vmatpush1.msra.mxu0 1.0
        %598 = vmatprep.subr.mxu0 0.0
        %599 = vmatpush1.msra.mxu0 1.0
        %600 = vmatprep.subr.mxu0 0.0
        %601 = vmatpush1.msra.mxu0 1.0
        %602 = vmatprep.subr.mxu0 0.0
        %603 = vmatpush1.msra.mxu0 1.0
        %604 = vmatprep.subr.mxu0 0.0
        %605 = vmatpush1.msra.mxu0 1.0
        %606 = vmatprep.subr.mxu0 0.0
        %607 = vmatpush1.msra.mxu0 0.0
        %608 = vmatprep.subr.mxu0 0.0
        %609 = vmatpush1.msra.mxu0 0.0
        %610 = vmatprep.subr.mxu0 0.0
        %611 = vmatpush1.msra.mxu0 0.0
        %612 = vmatprep.subr.mxu0 0.0
        %613 = vmatpush1.msra.mxu0 0.0
        %614 = vmatprep.subr.mxu0 0.0
        %615 = vmatpush1.msra.mxu0 0.0
        %616 = vmatprep.subr.mxu0 0.0
        %617 = vmatpush1.msra.mxu0 0.0
        %618 = vmatprep.subr.mxu0 0.0
        %619 = vmatpush1.msra.mxu0 0.0
        %620 = vmatprep.subr.mxu0 0.0
        %621 = vmatpush1.msra.mxu0 0.0
        %622 = vmatprep.subr.mxu0 0.0
        %623 = vmatpush1.msra.mxu0 0.0
        %624 = vmatprep.subr.mxu0 0.0
        %625 = vmatpush1.msra.mxu0 0.0
        %626 = vmatprep.subr.mxu0 0.0
        %627 = vmatpush1.msra.mxu0 0.0
        %628 = vmatprep.subr.mxu0 0.0
        %629 = vmatpush1.msra.mxu0 0.0
        %630 = vmatprep.subr.mxu0 0.0
        %631 = vmatpush1.msra.mxu0 0.0
        %632 = vmatprep.subr.mxu0 0.0
        %633 = vmatpush1.msra.mxu0 0.0
        %634 = vmatprep.subr.mxu0 0.0
        %635 = vmatpush1.msra.mxu0 0.0
        %636 = vmatprep.subr.mxu0 0.0
        %637 = vmatpush1.msra.mxu0 0.0
        %638 = vmatprep.mubr.f32.mxu0 0.0
        %v639 = vand.u32 %v207, 4294901760
        %640 = vmatmul.mubr.f32.gmra.mrb[0].mxu0 %v639
        %v641 = vpop.f32.mrb[0].mxu0
        %v642 = vadd.f32 %v571, %v641
        %v643 = vpop.f32.mrb[0].mxu0
        %644 = vdwg.mxu0
        %645 = vmatprep.subr.mxu0 0.0
        %646 = vmatpush1.msra.mxu0 1.0
        %647 = vmatprep.subr.mxu0 0.0
        %648 = vmatpush1.msra.mxu0 1.0
        %649 = vmatprep.subr.mxu0 0.0
        %650 = vmatpush1.msra.mxu0 1.0
        %651 = vmatprep.subr.mxu0 0.0
        %652 = vmatpush1.msra.mxu0 1.0
        %653 = vmatprep.subr.mxu0 0.0
        %654 = vmatpush1.msra.mxu0 1.0
        %655 = vmatprep.subr.mxu0 0.0
        %656 = vmatpush1.msra.mxu0 1.0
        %657 = vmatprep.subr.mxu0 0.0
        %658 = vmatpush1.msra.mxu0 1.0
        %659 = vmatprep.subr.mxu0 0.0
        %660 = vmatpush1.msra.mxu0 1.0
        %661 = vmatprep.subr.mxu0 0.0
        %662 = vmatpush1.msra.mxu0 1.0
        %663 = vmatprep.subr.mxu0 0.0
        %664 = vmatpush1.msra.mxu0 1.0
        %665 = vmatprep.subr.mxu0 0.0
        %666 = vmatpush1.msra.mxu0 1.0
        %667 = vmatprep.subr.mxu0 0.0
        %668 = vmatpush1.msra.mxu0 1.0
        %669 = vmatprep.subr.mxu0 0.0
        %670 = vmatpush1.msra.mxu0 1.0
        %671 = vmatprep.subr.mxu0 0.0
        %672 = vmatpush1.msra.mxu0 1.0
        %673 = vmatprep.subr.mxu0 0.0
        %674 = vmatpush1.msra.mxu0 1.0
        %675 = vmatprep.subr.mxu0 0.0
        %676 = vmatpush1.msra.mxu0 1.0
        %677 = vmatprep.subr.mxu0 0.0
        %678 = vmatpush1.msra.mxu0 0.0
        %679 = vmatprep.subr.mxu0 0.0
        %680 = vmatpush1.msra.mxu0 0.0
        %681 = vmatprep.subr.mxu0 0.0
        %682 = vmatpush1.msra.mxu0 0.0
        %683 = vmatprep.subr.mxu0 0.0
        %684 = vmatpush1.msra.mxu0 0.0
        %685 = vmatprep.subr.mxu0 0.0
        %686 = vmatpush1.msra.mxu0 0.0
        %687 = vmatprep.subr.mxu0 0.0
        %688 = vmatpush1.msra.mxu0 0.0
        %689 = vmatprep.subr.mxu0 0.0
        %690 = vmatpush1.msra.mxu0 0.0
        %691 = vmatprep.subr.mxu0 0.0
        %692 = vmatpush1.msra.mxu0 0.0
        %693 = vmatprep.subr.mxu0 0.0
        %694 = vmatpush1.msra.mxu0 0.0
        %695 = vmatprep.subr.mxu0 0.0
        %696 = vmatpush1.msra.mxu0 0.0
        %697 = vmatprep.subr.mxu0 0.0
        %698 = vmatpush1.msra.mxu0 0.0
        %699 = vmatprep.subr.mxu0 0.0
        %700 = vmatpush1.msra.mxu0 0.0
        %701 = vmatprep.subr.mxu0 0.0
        %702 = vmatpush1.msra.mxu0 0.0
        %703 = vmatprep.subr.mxu0 0.0
        %704 = vmatpush1.msra.mxu0 0.0
        %705 = vmatprep.subr.mxu0 0.0
        %706 = vmatpush1.msra.mxu0 0.0
        %707 = vmatprep.subr.mxu0 0.0
        %708 = vmatpush1.msra.mxu0 0.0
        %709 = vmatprep.mubr.f32.mxu0 0.0
        %v710 = vand.u32 %v209, 4294901760
        %v711 = vsub.f32 %v209, %v710
        %v712 = vand.u32 %v711, 4294901760
        %v713 = vsub.f32 %v711, %v712
        %v714 = vand.u32 %v713, 4294901760
        %715 = vmatmul.mubr.f32.gmra.mrb[0].mxu0 %v714
        %v716 = vpop.f32.mrb[0].mxu0
        %v717 = vadd.f32 0.0, %v716
        %v718 = vpop.f32.mrb[0].mxu0
        %719 = vdwg.mxu0
        %720 = vmatprep.subr.mxu0 0.0
        %721 = vmatpush1.msra.mxu0 0.0
        %722 = vmatprep.subr.mxu0 0.0
        %723 = vmatpush1.msra.mxu0 0.0
        %724 = vmatprep.subr.mxu0 0.0
        %725 = vmatpush1.msra.mxu0 0.0
        %726 = vmatprep.subr.mxu0 0.0
        %727 = vmatpush1.msra.mxu0 0.0
        %728 = vmatprep.subr.mxu0 0.0
        %729 = vmatpush1.msra.mxu0 0.0
        %730 = vmatprep.subr.mxu0 0.0
        %731 = vmatpush1.msra.mxu0 0.0
        %732 = vmatprep.subr.mxu0 0.0
        %733 = vmatpush1.msra.mxu0 0.0
        %734 = vmatprep.subr.mxu0 0.0
        %735 = vmatpush1.msra.mxu0 0.0
        %736 = vmatprep.subr.mxu0 0.0
        %737 = vmatpush1.msra.mxu0 0.0
        %738 = vmatprep.subr.mxu0 0.0
        %739 = vmatpush1.msra.mxu0 0.0
        %740 = vmatprep.subr.mxu0 0.0
        %741 = vmatpush1.msra.mxu0 0.0
        %742 = vmatprep.subr.mxu0 0.0
        %743 = vmatpush1.msra.mxu0 0.0
        %744 = vmatprep.subr.mxu0 0.0
        %745 = vmatpush1.msra.mxu0 0.0
        %746 = vmatprep.subr.mxu0 0.0
        %747 = vmatpush1.msra.mxu0 0.0
        %748 = vmatprep.subr.mxu0 0.0
        %749 = vmatpush1.msra.mxu0 0.0
        %750 = vmatprep.subr.mxu0 0.0
        %751 = vmatpush1.msra.mxu0 0.0
        %752 = vmatprep.subr.mxu0 0.0
        %753 = vmatpush1.msra.mxu0 0.0
        %754 = vmatprep.subr.mxu0 0.0
        %755 = vmatpush1.msra.mxu0 0.0
        %756 = vmatprep.subr.mxu0 0.0
        %757 = vmatpush1.msra.mxu0 0.0
        %758 = vmatprep.subr.mxu0 0.0
        %759 = vmatpush1.msra.mxu0 0.0
        %760 = vmatprep.subr.mxu0 0.0
        %761 = vmatpush1.msra.mxu0 0.0
        %762 = vmatprep.subr.mxu0 0.0
        %763 = vmatpush1.msra.mxu0 0.0
        %764 = vmatprep.subr.mxu0 0.0
        %765 = vmatpush1.msra.mxu0 0.0
        %766 = vmatprep.subr.mxu0 0.0
        %767 = vmatpush1.msra.mxu0 0.0
        %768 = vmatprep.subr.mxu0 0.0
        %769 = vmatpush1.msra.mxu0 0.0
        %770 = vmatprep.subr.mxu0 0.0
        %771 = vmatpush1.msra.mxu0 0.0
        %772 = vmatprep.subr.mxu0 0.0
        %773 = vmatpush1.msra.mxu0 0.0
        %774 = vmatprep.subr.mxu0 0.0
        %775 = vmatpush1.msra.mxu0 0.0
        %776 = vmatprep.subr.mxu0 0.0
        %777 = vmatpush1.msra.mxu0 0.0
        %778 = vmatprep.subr.mxu0 0.0
        %779 = vmatpush1.msra.mxu0 0.0
        %780 = vmatprep.subr.mxu0 0.0
        %781 = vmatpush1.msra.mxu0 0.0
        %782 = vmatprep.subr.mxu0 0.0
        %783 = vmatpush1.msra.mxu0 0.0
        %784 = vmatprep.mubr.f32.mxu0 0.0
        %v785 = vand.u32 %v209, 4294901760
        %786 = vmatmul.mubr.f32.gmra.mrb[0].mxu0 %v785
        %v787 = vpop.f32.mrb[0].mxu0
        %v788 = vadd.f32 %v717, %v787
        %v789 = vpop.f32.mrb[0].mxu0
        %790 = vdwg.mxu0
        %791 = vmatprep.subr.mxu0 0.0
        %792 = vmatpush1.msra.mxu0 0.0
        %793 = vmatprep.subr.mxu0 0.0
        %794 = vmatpush1.msra.mxu0 0.0
        %795 = vmatprep.subr.mxu0 0.0
        %796 = vmatpush1.msra.mxu0 0.0
        %797 = vmatprep.subr.mxu0 0.0
        %798 = vmatpush1.msra.mxu0 0.0
        %799 = vmatprep.subr.mxu0 0.0
        %800 = vmatpush1.msra.mxu0 0.0
        %801 = vmatprep.subr.mxu0 0.0
        %802 = vmatpush1.msra.mxu0 0.0
        %803 = vmatprep.subr.mxu0 0.0
        %804 = vmatpush1.msra.mxu0 0.0
        %805 = vmatprep.subr.mxu0 0.0
        %806 = vmatpush1.msra.mxu0 0.0
        %807 = vmatprep.subr.mxu0 0.0
        %808 = vmatpush1.msra.mxu0 0.0
        %809 = vmatprep.subr.mxu0 0.0
        %810 = vmatpush1.msra.mxu0 0.0
        %811 = vmatprep.subr.mxu0 0.0
        %812 = vmatpush1.msra.mxu0 0.0
        %813 = vmatprep.subr.mxu0 0.0
        %814 = vmatpush1.msra.mxu0 0.0
        %815 = vmatprep.subr.mxu0 0.0
        %816 = vmatpush1.msra.mxu0 0.0
        %817 = vmatprep.subr.mxu0 0.0
        %818 = vmatpush1.msra.mxu0 0.0
        %819 = vmatprep.subr.mxu0 0.0
        %820 = vmatpush1.msra.mxu0 0.0
        %821 = vmatprep.subr.mxu0 0.0
        %822 = vmatpush1.msra.mxu0 0.0
        %823 = vmatprep.subr.mxu0 0.0
        %824 = vmatpush1.msra.mxu0 0.0
        %825 = vmatprep.subr.mxu0 0.0
        %826 = vmatpush1.msra.mxu0 0.0
        %827 = vmatprep.subr.mxu0 0.0
        %828 = vmatpush1.msra.mxu0 0.0
        %829 = vmatprep.subr.mxu0 0.0
        %830 = vmatpush1.msra.mxu0 0.0
        %831 = vmatprep.subr.mxu0 0.0
        %832 = vmatpush1.msra.mxu0 0.0
        %833 = vmatprep.subr.mxu0 0.0
        %834 = vmatpush1.msra.mxu0 0.0
        %835 = vmatprep.subr.mxu0 0.0
        %836 = vmatpush1.msra.mxu0 0.0
        %837 = vmatprep.subr.mxu0 0.0
        %838 = vmatpush1.msra.mxu0 0.0
        %839 = vmatprep.subr.mxu0 0.0
        %840 = vmatpush1.msra.mxu0 0.0
        %841 = vmatprep.subr.mxu0 0.0
        %842 = vmatpush1.msra.mxu0 0.0
        %843 = vmatprep.subr.mxu0 0.0
        %844 = vmatpush1.msra.mxu0 0.0
        %845 = vmatprep.subr.mxu0 0.0
        %846 = vmatpush1.msra.mxu0 0.0
        %847 = vmatprep.subr.mxu0 0.0
        %848 = vmatpush1.msra.mxu0 0.0
        %849 = vmatprep.subr.mxu0 0.0
        %850 = vmatpush1.msra.mxu0 0.0
        %851 = vmatprep.subr.mxu0 0.0
        %852 = vmatpush1.msra.mxu0 0.0
        %853 = vmatprep.subr.mxu0 0.0
        %854 = vmatpush1.msra.mxu0 0.0
        %855 = vmatprep.mubr.f32.mxu0 0.0
        %v856 = vand.u32 %v209, 4294901760
        %v857 = vsub.f32 %v209, %v856
        %858 = vmatmul.mubr.f32.gmra.mrb[0].mxu0 %v857
        %v859 = vpop.f32.mrb[0].mxu0
        %v860 = vadd.f32 %v788, %v859
        %v861 = vpop.f32.mrb[0].mxu0
        %862 = vdwg.mxu0
        %863 = vmatprep.subr.mxu0 0.0
        %864 = vmatpush1.msra.mxu0 1.0
        %865 = vmatprep.subr.mxu0 0.0
        %866 = vmatpush1.msra.mxu0 1.0
        %867 = vmatprep.subr.mxu0 0.0
        %868 = vmatpush1.msra.mxu0 1.0
        %869 = vmatprep.subr.mxu0 0.0
        %870 = vmatpush1.msra.mxu0 1.0
        %871 = vmatprep.subr.mxu0 0.0
        %872 = vmatpush1.msra.mxu0 1.0
        %873 = vmatprep.subr.mxu0 0.0
        %874 = vmatpush1.msra.mxu0 1.0
        %875 = vmatprep.subr.mxu0 0.0
        %876 = vmatpush1.msra.mxu0 1.0
        %877 = vmatprep.subr.mxu0 0.0
        %878 = vmatpush1.msra.mxu0 1.0
        %879 = vmatprep.subr.mxu0 0.0
        %880 = vmatpush1.msra.mxu0 1.0
        %881 = vmatprep.subr.mxu0 0.0
        %882 = vmatpush1.msra.mxu0 1.0
        %883 = vmatprep.subr.mxu0 0.0
        %884 = vmatpush1.msra.mxu0 1.0
        %885 = vmatprep.subr.mxu0 0.0
        %886 = vmatpush1.msra.mxu0 1.0
        %887 = vmatprep.subr.mxu0 0.0
        %888 = vmatpush1.msra.mxu0 1.0
        %889 = vmatprep.subr.mxu0 0.0
        %890 = vmatpush1.msra.mxu0 1.0
        %891 = vmatprep.subr.mxu0 0.0
        %892 = vmatpush1.msra.mxu0 1.0
        %893 = vmatprep.subr.mxu0 0.0
        %894 = vmatpush1.msra.mxu0 1.0
        %895 = vmatprep.subr.mxu0 0.0
        %896 = vmatpush1.msra.mxu0 0.0
        %897 = vmatprep.subr.mxu0 0.0
        %898 = vmatpush1.msra.mxu0 0.0
        %899 = vmatprep.subr.mxu0 0.0
        %900 = vmatpush1.msra.mxu0 0.0
        %901 = vmatprep.subr.mxu0 0.0
        %902 = vmatpush1.msra.mxu0 0.0
        %903 = vmatprep.subr.mxu0 0.0
        %904 = vmatpush1.msra.mxu0 0.0
        %905 = vmatprep.subr.mxu0 0.0
        %906 = vmatpush1.msra.mxu0 0.0
        %907 = vmatprep.subr.mxu0 0.0
        %908 = vmatpush1.msra.mxu0 0.0
        %909 = vmatprep.subr.mxu0 0.0
        %910 = vmatpush1.msra.mxu0 0.0
        %911 = vmatprep.subr.mxu0 0.0
        %912 = vmatpush1.msra.mxu0 0.0
        %913 = vmatprep.subr.mxu0 0.0
        %914 = vmatpush1.msra.mxu0 0.0
        %915 = vmatprep.subr.mxu0 0.0
        %916 = vmatpush1.msra.mxu0 0.0
        %917 = vmatprep.subr.mxu0 0.0
        %918 = vmatpush1.msra.mxu0 0.0
        %919 = vmatprep.subr.mxu0 0.0
        %920 = vmatpush1.msra.mxu0 0.0
        %921 = vmatprep.subr.mxu0 0.0
        %922 = vmatpush1.msra.mxu0 0.0
        %923 = vmatprep.subr.mxu0 0.0
        %924 = vmatpush1.msra.mxu0 0.0
        %925 = vmatprep.subr.mxu0 0.0
        %926 = vmatpush1.msra.mxu0 0.0
        %927 = vmatprep.mubr.f32.mxu0 0.0
        %v928 = vand.u32 %v209, 4294901760
        %v929 = vsub.f32 %v209, %v928
        %v930 = vand.u32 %v929, 4294901760
        %931 = vmatmul.mubr.f32.gmra.mrb[0].mxu0 %v930
        %v932 = vpop.f32.mrb[0].mxu0
        %v933 = vadd.f32 %v860, %v932
        %v934 = vpop.f32.mrb[0].mxu0
        %935 = vdwg.mxu0
        %936 = vmatprep.subr.mxu0 0.0
        %937 = vmatpush1.msra.mxu0 0.0
        %938 = vmatprep.subr.mxu0 0.0
        %939 = vmatpush1.msra.mxu0 0.0
        %940 = vmatprep.subr.mxu0 0.0
        %941 = vmatpush1.msra.mxu0 0.0
        %942 = vmatprep.subr.mxu0 0.0
        %943 = vmatpush1.msra.mxu0 0.0
        %944 = vmatprep.subr.mxu0 0.0
        %945 = vmatpush1.msra.mxu0 0.0
        %946 = vmatprep.subr.mxu0 0.0
        %947 = vmatpush1.msra.mxu0 0.0
        %948 = vmatprep.subr.mxu0 0.0
        %949 = vmatpush1.msra.mxu0 0.0
        %950 = vmatprep.subr.mxu0 0.0
        %951 = vmatpush1.msra.mxu0 0.0
        %952 = vmatprep.subr.mxu0 0.0
        %953 = vmatpush1.msra.mxu0 0.0
        %954 = vmatprep.subr.mxu0 0.0
        %955 = vmatpush1.msra.mxu0 0.0
        %956 = vmatprep.subr.mxu0 0.0
        %957 = vmatpush1.msra.mxu0 0.0
        %958 = vmatprep.subr.mxu0 0.0
        %959 = vmatpush1.msra.mxu0 0.0
        %960 = vmatprep.subr.mxu0 0.0
        %961 = vmatpush1.msra.mxu0 0.0
        %962 = vmatprep.subr.mxu0 0.0
        %963 = vmatpush1.msra.mxu0 0.0
        %964 = vmatprep.subr.mxu0 0.0
        %965 = vmatpush1.msra.mxu0 0.0
        %966 = vmatprep.subr.mxu0 0.0
        %967 = vmatpush1.msra.mxu0 0.0
        %968 = vmatprep.subr.mxu0 0.0
        %969 = vmatpush1.msra.mxu0 0.0
        %970 = vmatprep.subr.mxu0 0.0
        %971 = vmatpush1.msra.mxu0 0.0
        %972 = vmatprep.subr.mxu0 0.0
        %973 = vmatpush1.msra.mxu0 0.0
        %974 = vmatprep.subr.mxu0 0.0
        %975 = vmatpush1.msra.mxu0 0.0
        %976 = vmatprep.subr.mxu0 0.0
        %977 = vmatpush1.msra.mxu0 0.0
        %978 = vmatprep.subr.mxu0 0.0
        %979 = vmatpush1.msra.mxu0 0.0
        %980 = vmatprep.subr.mxu0 0.0
        %981 = vmatpush1.msra.mxu0 0.0
        %982 = vmatprep.subr.mxu0 0.0
        %983 = vmatpush1.msra.mxu0 0.0
        %984 = vmatprep.subr.mxu0 0.0
        %985 = vmatpush1.msra.mxu0 0.0
        %986 = vmatprep.subr.mxu0 0.0
        %987 = vmatpush1.msra.mxu0 0.0
        %988 = vmatprep.subr.mxu0 0.0
        %989 = vmatpush1.msra.mxu0 0.0
        %990 = vmatprep.subr.mxu0 0.0
        %991 = vmatpush1.msra.mxu0 0.0
        %992 = vmatprep.subr.mxu0 0.0
        %993 = vmatpush1.msra.mxu0 0.0
        %994 = vmatprep.subr.mxu0 0.0
        %995 = vmatpush1.msra.mxu0 0.0
        %996 = vmatprep.subr.mxu0 0.0
        %997 = vmatpush1.msra.mxu0 0.0
        %998 = vmatprep.subr.mxu0 0.0
        %999 = vmatpush1.msra.mxu0 0.0
        %1000 = vmatprep.mubr.f32.mxu0 0.0
        %v1001 = vand.u32 %v209, 4294901760
        %1002 = vmatmul.mubr.f32.gmra.mrb[0].mxu0 %v1001
        %v1003 = vpop.f32.mrb[0].mxu0
        %v1004 = vadd.f32 %v933, %v1003
        %v1005 = vpop.f32.mrb[0].mxu0
        %1006 = vdwg.mxu0
        %1007 = vmatprep.subr.mxu0 0.0
        %1008 = vmatpush1.msra.mxu0 1.0
        %1009 = vmatprep.subr.mxu0 0.0
        %1010 = vmatpush1.msra.mxu0 1.0
        %1011 = vmatprep.subr.mxu0 0.0
        %1012 = vmatpush1.msra.mxu0 1.0
        %1013 = vmatprep.subr.mxu0 0.0
        %1014 = vmatpush1.msra.mxu0 1.0
        %1015 = vmatprep.subr.mxu0 0.0
        %1016 = vmatpush1.msra.mxu0 1.0
        %1017 = vmatprep.subr.mxu0 0.0
        %1018 = vmatpush1.msra.mxu0 1.0
        %1019 = vmatprep.subr.mxu0 0.0
        %1020 = vmatpush1.msra.mxu0 1.0
        %1021 = vmatprep.subr.mxu0 0.0
        %1022 = vmatpush1.msra.mxu0 1.0
        %1023 = vmatprep.subr.mxu0 0.0
        %1024 = vmatpush1.msra.mxu0 1.0
        %1025 = vmatprep.subr.mxu0 0.0
        %1026 = vmatpush1.msra.mxu0 1.0
        %1027 = vmatprep.subr.mxu0 0.0
        %1028 = vmatpush1.msra.mxu0 1.0
        %1029 = vmatprep.subr.mxu0 0.0
        %1030 = vmatpush1.msra.mxu0 1.0
        %1031 = vmatprep.subr.mxu0 0.0
        %1032 = vmatpush1.msra.mxu0 1.0
        %1033 = vmatprep.subr.mxu0 0.0
        %1034 = vmatpush1.msra.mxu0 1.0
        %1035 = vmatprep.subr.mxu0 0.0
        %1036 = vmatpush1.msra.mxu0 1.0
        %1037 = vmatprep.subr.mxu0 0.0
        %1038 = vmatpush1.msra.mxu0 1.0
        %1039 = vmatprep.subr.mxu0 0.0
        %1040 = vmatpush1.msra.mxu0 0.0
        %1041 = vmatprep.subr.mxu0 0.0
        %1042 = vmatpush1.msra.mxu0 0.0
        %1043 = vmatprep.subr.mxu0 0.0
        %1044 = vmatpush1.msra.mxu0 0.0
        %1045 = vmatprep.subr.mxu0 0.0
        %1046 = vmatpush1.msra.mxu0 0.0
        %1047 = vmatprep.subr.mxu0 0.0
        %1048 = vmatpush1.msra.mxu0 0.0
        %1049 = vmatprep.subr.mxu0 0.0
        %1050 = vmatpush1.msra.mxu0 0.0
        %1051 = vmatprep.subr.mxu0 0.0
        %1052 = vmatpush1.msra.mxu0 0.0
        %1053 = vmatprep.subr.mxu0 0.0
        %1054 = vmatpush1.msra.mxu0 0.0
        %1055 = vmatprep.subr.mxu0 0.0
        %1056 = vmatpush1.msra.mxu0 0.0
        %1057 = vmatprep.subr.mxu0 0.0
        %1058 = vmatpush1.msra.mxu0 0.0
        %1059 = vmatprep.subr.mxu0 0.0
        %1060 = vmatpush1.msra.mxu0 0.0
        %1061 = vmatprep.subr.mxu0 0.0
        %1062 = vmatpush1.msra.mxu0 0.0
        %1063 = vmatprep.subr.mxu0 0.0
        %1064 = vmatpush1.msra.mxu0 0.0
        %1065 = vmatprep.subr.mxu0 0.0
        %1066 = vmatpush1.msra.mxu0 0.0
        %1067 = vmatprep.subr.mxu0 0.0
        %1068 = vmatpush1.msra.mxu0 0.0
        %1069 = vmatprep.subr.mxu0 0.0
        %1070 = vmatpush1.msra.mxu0 0.0
        %1071 = vmatprep.mubr.f32.mxu0 0.0
        %v1072 = vand.u32 %v209, 4294901760
        %1073 = vmatmul.mubr.f32.gmra.mrb[0].mxu0 %v1072
        %v1074 = vpop.f32.mrb[0].mxu0
        %v1075 = vadd.f32 %v1004, %v1074
        %v1076 = vpop.f32.mrb[0].mxu0
        %1077 = vdwg.mxu0
        %1078 = vmatprep.subr.mxu0 0.0
        %1079 = vmatpush1.msra.mxu0 1.0
        %1080 = vmatprep.subr.mxu0 0.0
        %1081 = vmatpush1.msra.mxu0 1.0
        %1082 = vmatprep.subr.mxu0 0.0
        %1083 = vmatpush1.msra.mxu0 1.0
        %1084 = vmatprep.subr.mxu0 0.0
        %1085 = vmatpush1.msra.mxu0 1.0
        %1086 = vmatprep.subr.mxu0 0.0
        %1087 = vmatpush1.msra.mxu0 1.0
        %1088 = vmatprep.subr.mxu0 0.0
        %1089 = vmatpush1.msra.mxu0 1.0
        %1090 = vmatprep.subr.mxu0 0.0
        %1091 = vmatpush1.msra.mxu0 1.0
        %1092 = vmatprep.subr.mxu0 0.0
        %1093 = vmatpush1.msra.mxu0 1.0
        %1094 = vmatprep.subr.mxu0 0.0
        %1095 = vmatpush1.msra.mxu0 1.0
        %1096 = vmatprep.subr.mxu0 0.0
        %1097 = vmatpush1.msra.mxu0 1.0
        %1098 = vmatprep.subr.mxu0 0.0
        %1099 = vmatpush1.msra.mxu0 1.0
        %1100 = vmatprep.subr.mxu0 0.0
        %1101 = vmatpush1.msra.mxu0 1.0
        %1102 = vmatprep.subr.mxu0 0.0
        %1103 = vmatpush1.msra.mxu0 1.0
        %1104 = vmatprep.subr.mxu0 0.0
        %1105 = vmatpush1.msra.mxu0 1.0
        %1106 = vmatprep.subr.mxu0 0.0
        %1107 = vmatpush1.msra.mxu0 1.0
        %1108 = vmatprep.subr.mxu0 0.0
        %1109 = vmatpush1.msra.mxu0 1.0
        %1110 = vmatprep.subr.mxu0 0.0
        %1111 = vmatpush1.msra.mxu0 0.0
        %1112 = vmatprep.subr.mxu0 0.0
        %1113 = vmatpush1.msra.mxu0 0.0
        %1114 = vmatprep.subr.mxu0 0.0
        %1115 = vmatpush1.msra.mxu0 0.0
        %1116 = vmatprep.subr.mxu0 0.0
        %1117 = vmatpush1.msra.mxu0 0.0
        %1118 = vmatprep.subr.mxu0 0.0
        %1119 = vmatpush1.msra.mxu0 0.0
        %1120 = vmatprep.subr.mxu0 0.0
        %1121 = vmatpush1.msra.mxu0 0.0
        %1122 = vmatprep.subr.mxu0 0.0
        %1123 = vmatpush1.msra.mxu0 0.0
        %1124 = vmatprep.subr.mxu0 0.0
        %1125 = vmatpush1.msra.mxu0 0.0
        %1126 = vmatprep.subr.mxu0 0.0
        %1127 = vmatpush1.msra.mxu0 0.0
        %1128 = vmatprep.subr.mxu0 0.0
        %1129 = vmatpush1.msra.mxu0 0.0
        %1130 = vmatprep.subr.mxu0 0.0
        %1131 = vmatpush1.msra.mxu0 0.0
        %1132 = vmatprep.subr.mxu0 0.0
        %1133 = vmatpush1.msra.mxu0 0.0
        %1134 = vmatprep.subr.mxu0 0.0
        %1135 = vmatpush1.msra.mxu0 0.0
        %1136 = vmatprep.subr.mxu0 0.0
        %1137 = vmatpush1.msra.mxu0 0.0
        %1138 = vmatprep.subr.mxu0 0.0
        %1139 = vmatpush1.msra.mxu0 0.0
        %1140 = vmatprep.subr.mxu0 0.0
        %1141 = vmatpush1.msra.mxu0 0.0
        %1142 = vmatprep.mubr.f32.mxu0 0.0
        %v1143 = vand.u32 %v211, 4294901760
        %v1144 = vsub.f32 %v211, %v1143
        %v1145 = vand.u32 %v1144, 4294901760
        %v1146 = vsub.f32 %v1144, %v1145
        %v1147 = vand.u32 %v1146, 4294901760
        %1148 = vmatmul.mubr.f32.gmra.mrb[0].mxu0 %v1147
        %v1149 = vpop.f32.mrb[0].mxu0
        %v1150 = vadd.f32 0.0, %v1149
        %v1151 = vpop.f32.mrb[0].mxu0
        %1152 = vdwg.mxu0
        %1153 = vmatprep.subr.mxu0 0.0
        %1154 = vmatpush1.msra.mxu0 0.0
        %1155 = vmatprep.subr.mxu0 0.0
        %1156 = vmatpush1.msra.mxu0 0.0
        %1157 = vmatprep.subr.mxu0 0.0
        %1158 = vmatpush1.msra.mxu0 0.0
        %1159 = vmatprep.subr.mxu0 0.0
        %1160 = vmatpush1.msra.mxu0 0.0
        %1161 = vmatprep.subr.mxu0 0.0
        %1162 = vmatpush1.msra.mxu0 0.0
        %1163 = vmatprep.subr.mxu0 0.0
        %1164 = vmatpush1.msra.mxu0 0.0
        %1165 = vmatprep.subr.mxu0 0.0
        %1166 = vmatpush1.msra.mxu0 0.0
        %1167 = vmatprep.subr.mxu0 0.0
        %1168 = vmatpush1.msra.mxu0 0.0
        %1169 = vmatprep.subr.mxu0 0.0
        %1170 = vmatpush1.msra.mxu0 0.0
        %1171 = vmatprep.subr.mxu0 0.0
        %1172 = vmatpush1.msra.mxu0 0.0
        %1173 = vmatprep.subr.mxu0 0.0
        %1174 = vmatpush1.msra.mxu0 0.0
        %1175 = vmatprep.subr.mxu0 0.0
        %1176 = vmatpush1.msra.mxu0 0.0
        %1177 = vmatprep.subr.mxu0 0.0
        %1178 = vmatpush1.msra.mxu0 0.0
        %1179 = vmatprep.subr.mxu0 0.0
        %1180 = vmatpush1.msra.mxu0 0.0
        %1181 = vmatprep.subr.mxu0 0.0
        %1182 = vmatpush1.msra.mxu0 0.0
        %1183 = vmatprep.subr.mxu0 0.0
        %1184 = vmatpush1.msra.mxu0 0.0
        %1185 = vmatprep.subr.mxu0 0.0
        %1186 = vmatpush1.msra.mxu0 0.0
        %1187 = vmatprep.subr.mxu0 0.0
        %1188 = vmatpush1.msra.mxu0 0.0
        %1189 = vmatprep.subr.mxu0 0.0
        %1190 = vmatpush1.msra.mxu0 0.0
        %1191 = vmatprep.subr.mxu0 0.0
        %1192 = vmatpush1.msra.mxu0 0.0
        %1193 = vmatprep.subr.mxu0 0.0
        %1194 = vmatpush1.msra.mxu0 0.0
        %1195 = vmatprep.subr.mxu0 0.0
        %1196 = vmatpush1.msra.mxu0 0.0
        %1197 = vmatprep.subr.mxu0 0.0
        %1198 = vmatpush1.msra.mxu0 0.0
        %1199 = vmatprep.subr.mxu0 0.0
        %1200 = vmatpush1.msra.mxu0 0.0
        %1201 = vmatprep.subr.mxu0 0.0
        %1202 = vmatpush1.msra.mxu0 0.0
        %1203 = vmatprep.subr.mxu0 0.0
        %1204 = vmatpush1.msra.mxu0 0.0
        %1205 = vmatprep.subr.mxu0 0.0
        %1206 = vmatpush1.msra.mxu0 0.0
        %1207 = vmatprep.subr.mxu0 0.0
        %1208 = vmatpush1.msra.mxu0 0.0
        %1209 = vmatprep.subr.mxu0 0.0
        %1210 = vmatpush1.msra.mxu0 0.0
        %1211 = vmatprep.subr.mxu0 0.0
        %1212 = vmatpush1.msra.mxu0 0.0
        %1213 = vmatprep.subr.mxu0 0.0
        %1214 = vmatpush1.msra.mxu0 0.0
        %1215 = vmatprep.subr.mxu0 0.0
        %1216 = vmatpush1.msra.mxu0 0.0
        %1217 = vmatprep.mubr.f32.mxu0 0.0
        %v1218 = vand.u32 %v211, 4294901760
        %1219 = vmatmul.mubr.f32.gmra.mrb[0].mxu0 %v1218
        %v1220 = vpop.f32.mrb[0].mxu0
        %v1221 = vadd.f32 %v1150, %v1220
        %v1222 = vpop.f32.mrb[0].mxu0
        %1223 = vdwg.mxu0
        %1224 = vmatprep.subr.mxu0 0.0
        %1225 = vmatpush1.msra.mxu0 0.0
        %1226 = vmatprep.subr.mxu0 0.0
        %1227 = vmatpush1.msra.mxu0 0.0
        %1228 = vmatprep.subr.mxu0 0.0
        %1229 = vmatpush1.msra.mxu0 0.0
        %1230 = vmatprep.subr.mxu0 0.0
        %1231 = vmatpush1.msra.mxu0 0.0
        %1232 = vmatprep.subr.mxu0 0.0
        %1233 = vmatpush1.msra.mxu0 0.0
        %1234 = vmatprep.subr.mxu0 0.0
        %1235 = vmatpush1.msra.mxu0 0.0
        %1236 = vmatprep.subr.mxu0 0.0
        %1237 = vmatpush1.msra.mxu0 0.0
        %1238 = vmatprep.subr.mxu0 0.0
        %1239 = vmatpush1.msra.mxu0 0.0
        %1240 = vmatprep.subr.mxu0 0.0
        %1241 = vmatpush1.msra.mxu0 0.0
        %1242 = vmatprep.subr.mxu0 0.0
        %1243 = vmatpush1.msra.mxu0 0.0
        %1244 = vmatprep.subr.mxu0 0.0
        %1245 = vmatpush1.msra.mxu0 0.0
        %1246 = vmatprep.subr.mxu0 0.0
        %1247 = vmatpush1.msra.mxu0 0.0
        %1248 = vmatprep.subr.mxu0 0.0
        %1249 = vmatpush1.msra.mxu0 0.0
        %1250 = vmatprep.subr.mxu0 0.0
        %1251 = vmatpush1.msra.mxu0 0.0
        %1252 = vmatprep.subr.mxu0 0.0
        %1253 = vmatpush1.msra.mxu0 0.0
        %1254 = vmatprep.subr.mxu0 0.0
        %1255 = vmatpush1.msra.mxu0 0.0
        %1256 = vmatprep.subr.mxu0 0.0
        %1257 = vmatpush1.msra.mxu0 0.0
        %1258 = vmatprep.subr.mxu0 0.0
        %1259 = vmatpush1.msra.mxu0 0.0
        %1260 = vmatprep.subr.mxu0 0.0
        %1261 = vmatpush1.msra.mxu0 0.0
        %1262 = vmatprep.subr.mxu0 0.0
        %1263 = vmatpush1.msra.mxu0 0.0
        %1264 = vmatprep.subr.mxu0 0.0
        %1265 = vmatpush1.msra.mxu0 0.0
        %1266 = vmatprep.subr.mxu0 0.0
        %1267 = vmatpush1.msra.mxu0 0.0
        %1268 = vmatprep.subr.mxu0 0.0
        %1269 = vmatpush1.msra.mxu0 0.0
        %1270 = vmatprep.subr.mxu0 0.0
        %1271 = vmatpush1.msra.mxu0 0.0
        %1272 = vmatprep.subr.mxu0 0.0
        %1273 = vmatpush1.msra.mxu0 0.0
        %1274 = vmatprep.subr.mxu0 0.0
        %1275 = vmatpush1.msra.mxu0 0.0
        %1276 = vmatprep.subr.mxu0 0.0
        %1277 = vmatpush1.msra.mxu0 0.0
        %1278 = vmatprep.subr.mxu0 0.0
        %1279 = vmatpush1.msra.mxu0 0.0
        %1280 = vmatprep.subr.mxu0 0.0
        %1281 = vmatpush1.msra.mxu0 0.0
        %1282 = vmatprep.subr.mxu0 0.0
        %1283 = vmatpush1.msra.mxu0 0.0
        %1284 = vmatprep.subr.mxu0 0.0
        %1285 = vmatpush1.msra.mxu0 0.0
        %1286 = vmatprep.subr.mxu0 0.0
        %1287 = vmatpush1.msra.mxu0 0.0
        %1288 = vmatprep.mubr.f32.mxu0 0.0
        %v1289 = vand.u32 %v211, 4294901760
        %v1290 = vsub.f32 %v211, %v1289
        %1291 = vmatmul.mubr.f32.gmra.mrb[0].mxu0 %v1290
        %v1292 = vpop.f32.mrb[0].mxu0
        %v1293 = vadd.f32 %v1221, %v1292
        %v1294 = vpop.f32.mrb[0].mxu0
        %1295 = vdwg.mxu0
        %1296 = vmatprep.subr.mxu0 0.0
        %1297 = vmatpush1.msra.mxu0 1.0
        %1298 = vmatprep.subr.mxu0 0.0
        %1299 = vmatpush1.msra.mxu0 1.0
        %1300 = vmatprep.subr.mxu0 0.0
        %1301 = vmatpush1.msra.mxu0 1.0
        %1302 = vmatprep.subr.mxu0 0.0
        %1303 = vmatpush1.msra.mxu0 1.0
        %1304 = vmatprep.subr.mxu0 0.0
        %1305 = vmatpush1.msra.mxu0 1.0
        %1306 = vmatprep.subr.mxu0 0.0
        %1307 = vmatpush1.msra.mxu0 1.0
        %1308 = vmatprep.subr.mxu0 0.0
        %1309 = vmatpush1.msra.mxu0 1.0
        %1310 = vmatprep.subr.mxu0 0.0
        %1311 = vmatpush1.msra.mxu0 1.0
        %1312 = vmatprep.subr.mxu0 0.0
        %1313 = vmatpush1.msra.mxu0 1.0
        %1314 = vmatprep.subr.mxu0 0.0
        %1315 = vmatpush1.msra.mxu0 1.0
        %1316 = vmatprep.subr.mxu0 0.0
        %1317 = vmatpush1.msra.mxu0 1.0
        %1318 = vmatprep.subr.mxu0 0.0
        %1319 = vmatpush1.msra.mxu0 1.0
        %1320 = vmatprep.subr.mxu0 0.0
        %1321 = vmatpush1.msra.mxu0 1.0
        %1322 = vmatprep.subr.mxu0 0.0
        %1323 = vmatpush1.msra.mxu0 1.0
        %1324 = vmatprep.subr.mxu0 0.0
        %1325 = vmatpush1.msra.mxu0 1.0
        %1326 = vmatprep.subr.mxu0 0.0
        %1327 = vmatpush1.msra.mxu0 1.0
        %1328 = vmatprep.subr.mxu0 0.0
        %1329 = vmatpush1.msra.mxu0 0.0
        %1330 = vmatprep.subr.mxu0 0.0
        %1331 = vmatpush1.msra.mxu0 0.0
        %1332 = vmatprep.subr.mxu0 0.0
        %1333 = vmatpush1.msra.mxu0 0.0
        %1334 = vmatprep.subr.mxu0 0.0
        %1335 = vmatpush1.msra.mxu0 0.0
        %1336 = vmatprep.subr.mxu0 0.0
        %1337 = vmatpush1.msra.mxu0 0.0
        %1338 = vmatprep.subr.mxu0 0.0
        %1339 = vmatpush1.msra.mxu0 0.0
        %1340 = vmatprep.subr.mxu0 0.0
        %1341 = vmatpush1.msra.mxu0 0.0
        %1342 = vmatprep.subr.mxu0 0.0
        %1343 = vmatpush1.msra.mxu0 0.0
        %1344 = vmatprep.subr.mxu0 0.0
        %1345 = vmatpush1.msra.mxu0 0.0
        %1346 = vmatprep.subr.mxu0 0.0
        %1347 = vmatpush1.msra.mxu0 0.0
        %1348 = vmatprep.subr.mxu0 0.0
        %1349 = vmatpush1.msra.mxu0 0.0
        %1350 = vmatprep.subr.mxu0 0.0
        %1351 = vmatpush1.msra.mxu0 0.0
        %1352 = vmatprep.subr.mxu0 0.0
        %1353 = vmatpush1.msra.mxu0 0.0
        %1354 = vmatprep.subr.mxu0 0.0
        %1355 = vmatpush1.msra.mxu0 0.0
        %1356 = vmatprep.subr.mxu0 0.0
        %1357 = vmatpush1.msra.mxu0 0.0
        %1358 = vmatprep.subr.mxu0 0.0
        %1359 = vmatpush1.msra.mxu0 0.0
        %1360 = vmatprep.mubr.f32.mxu0 0.0
        %v1361 = vand.u32 %v211, 4294901760
        %v1362 = vsub.f32 %v211, %v1361
        %v1363 = vand.u32 %v1362, 4294901760
        %1364 = vmatmul.mubr.f32.gmra.mrb[0].mxu0 %v1363
        %v1365 = vpop.f32.mrb[0].mxu0
        %v1366 = vadd.f32 %v1293, %v1365
        %v1367 = vpop.f32.mrb[0].mxu0
        %1368 = vdwg.mxu0
        %1369 = vmatprep.subr.mxu0 0.0
        %1370 = vmatpush1.msra.mxu0 0.0
        %1371 = vmatprep.subr.mxu0 0.0
        %1372 = vmatpush1.msra.mxu0 0.0
        %1373 = vmatprep.subr.mxu0 0.0
        %1374 = vmatpush1.msra.mxu0 0.0
        %1375 = vmatprep.subr.mxu0 0.0
        %1376 = vmatpush1.msra.mxu0 0.0
        %1377 = vmatprep.subr.mxu0 0.0
        %1378 = vmatpush1.msra.mxu0 0.0
        %1379 = vmatprep.subr.mxu0 0.0
        %1380 = vmatpush1.msra.mxu0 0.0
        %1381 = vmatprep.subr.mxu0 0.0
        %1382 = vmatpush1.msra.mxu0 0.0
        %1383 = vmatprep.subr.mxu0 0.0
        %1384 = vmatpush1.msra.mxu0 0.0
        %1385 = vmatprep.subr.mxu0 0.0
        %1386 = vmatpush1.msra.mxu0 0.0
        %1387 = vmatprep.subr.mxu0 0.0
        %1388 = vmatpush1.msra.mxu0 0.0
        %1389 = vmatprep.subr.mxu0 0.0
        %1390 = vmatpush1.msra.mxu0 0.0
        %1391 = vmatprep.subr.mxu0 0.0
        %1392 = vmatpush1.msra.mxu0 0.0
        %1393 = vmatprep.subr.mxu0 0.0
        %1394 = vmatpush1.msra.mxu0 0.0
        %1395 = vmatprep.subr.mxu0 0.0
        %1396 = vmatpush1.msra.mxu0 0.0
        %1397 = vmatprep.subr.mxu0 0.0
        %1398 = vmatpush1.msra.mxu0 0.0
        %1399 = vmatprep.subr.mxu0 0.0
        %1400 = vmatpush1.msra.mxu0 0.0
        %1401 = vmatprep.subr.mxu0 0.0
        %1402 = vmatpush1.msra.mxu0 0.0
        %1403 = vmatprep.subr.mxu0 0.0
        %1404 = vmatpush1.msra.mxu0 0.0
        %1405 = vmatprep.subr.mxu0 0.0
        %1406 = vmatpush1.msra.mxu0 0.0
        %1407 = vmatprep.subr.mxu0 0.0
        %1408 = vmatpush1.msra.mxu0 0.0
        %1409 = vmatprep.subr.mxu0 0.0
        %1410 = vmatpush1.msra.mxu0 0.0
        %1411 = vmatprep.subr.mxu0 0.0
        %1412 = vmatpush1.msra.mxu0 0.0
        %1413 = vmatprep.subr.mxu0 0.0
        %1414 = vmatpush1.msra.mxu0 0.0
        %1415 = vmatprep.subr.mxu0 0.0
        %1416 = vmatpush1.msra.mxu0 0.0
        %1417 = vmatprep.subr.mxu0 0.0
        %1418 = vmatpush1.msra.mxu0 0.0
        %1419 = vmatprep.subr.mxu0 0.0
        %1420 = vmatpush1.msra.mxu0 0.0
        %1421 = vmatprep.subr.mxu0 0.0
        %1422 = vmatpush1.msra.mxu0 0.0
        %1423 = vmatprep.subr.mxu0 0.0
        %1424 = vmatpush1.msra.mxu0 0.0
        %1425 = vmatprep.subr.mxu0 0.0
        %1426 = vmatpush1.msra.mxu0 0.0
        %1427 = vmatprep.subr.mxu0 0.0
        %1428 = vmatpush1.msra.mxu0 0.0
        %1429 = vmatprep.subr.mxu0 0.0
        %1430 = vmatpush1.msra.mxu0 0.0
        %1431 = vmatprep.subr.mxu0 0.0
        %1432 = vmatpush1.msra.mxu0 0.0
        %1433 = vmatprep.mubr.f32.mxu0 0.0
        %v1434 = vand.u32 %v211, 4294901760
        %1435 = vmatmul.mubr.f32.gmra.mrb[0].mxu0 %v1434
        %v1436 = vpop.f32.mrb[0].mxu0
        %v1437 = vadd.f32 %v1366, %v1436
        %v1438 = vpop.f32.mrb[0].mxu0
        %1439 = vdwg.mxu0
        %1440 = vmatprep.subr.mxu0 0.0
        %1441 = vmatpush1.msra.mxu0 1.0
        %1442 = vmatprep.subr.mxu0 0.0
        %1443 = vmatpush1.msra.mxu0 1.0
        %1444 = vmatprep.subr.mxu0 0.0
        %1445 = vmatpush1.msra.mxu0 1.0
        %1446 = vmatprep.subr.mxu0 0.0
        %1447 = vmatpush1.msra.mxu0 1.0
        %1448 = vmatprep.subr.mxu0 0.0
        %1449 = vmatpush1.msra.mxu0 1.0
        %1450 = vmatprep.subr.mxu0 0.0
        %1451 = vmatpush1.msra.mxu0 1.0
        %1452 = vmatprep.subr.mxu0 0.0
        %1453 = vmatpush1.msra.mxu0 1.0
        %1454 = vmatprep.subr.mxu0 0.0
        %1455 = vmatpush1.msra.mxu0 1.0
        %1456 = vmatprep.subr.mxu0 0.0
        %1457 = vmatpush1.msra.mxu0 1.0
        %1458 = vmatprep.subr.mxu0 0.0
        %1459 = vmatpush1.msra.mxu0 1.0
        %1460 = vmatprep.subr.mxu0 0.0
        %1461 = vmatpush1.msra.mxu0 1.0
        %1462 = vmatprep.subr.mxu0 0.0
        %1463 = vmatpush1.msra.mxu0 1.0
        %1464 = vmatprep.subr.mxu0 0.0
        %1465 = vmatpush1.msra.mxu0 1.0
        %1466 = vmatprep.subr.mxu0 0.0
        %1467 = vmatpush1.msra.mxu0 1.0
        %1468 = vmatprep.subr.mxu0 0.0
        %1469 = vmatpush1.msra.mxu0 1.0
        %1470 = vmatprep.subr.mxu0 0.0
        %1471 = vmatpush1.msra.mxu0 1.0
        %1472 = vmatprep.subr.mxu0 0.0
        %1473 = vmatpush1.msra.mxu0 0.0
        %1474 = vmatprep.subr.mxu0 0.0
        %1475 = vmatpush1.msra.mxu0 0.0
        %1476 = vmatprep.subr.mxu0 0.0
        %1477 = vmatpush1.msra.mxu0 0.0
        %1478 = vmatprep.subr.mxu0 0.0
        %1479 = vmatpush1.msra.mxu0 0.0
        %1480 = vmatprep.subr.mxu0 0.0
        %1481 = vmatpush1.msra.mxu0 0.0
        %1482 = vmatprep.subr.mxu0 0.0
        %1483 = vmatpush1.msra.mxu0 0.0
        %1484 = vmatprep.subr.mxu0 0.0
        %1485 = vmatpush1.msra.mxu0 0.0
        %1486 = vmatprep.subr.mxu0 0.0
        %1487 = vmatpush1.msra.mxu0 0.0
        %1488 = vmatprep.subr.mxu0 0.0
        %1489 = vmatpush1.msra.mxu0 0.0
        %1490 = vmatprep.subr.mxu0 0.0
        %1491 = vmatpush1.msra.mxu0 0.0
        %1492 = vmatprep.subr.mxu0 0.0
        %1493 = vmatpush1.msra.mxu0 0.0
        %1494 = vmatprep.subr.mxu0 0.0
        %1495 = vmatpush1.msra.mxu0 0.0
        %1496 = vmatprep.subr.mxu0 0.0
        %1497 = vmatpush1.msra.mxu0 0.0
        %1498 = vmatprep.subr.mxu0 0.0
        %1499 = vmatpush1.msra.mxu0 0.0
        %1500 = vmatprep.subr.mxu0 0.0
        %1501 = vmatpush1.msra.mxu0 0.0
        %1502 = vmatprep.subr.mxu0 0.0
        %1503 = vmatpush1.msra.mxu0 0.0
        %1504 = vmatprep.mubr.f32.mxu0 0.0
        %v1505 = vand.u32 %v211, 4294901760
        %1506 = vmatmul.mubr.f32.gmra.mrb[0].mxu0 %v1505
        %v1507 = vpop.f32.mrb[0].mxu0
        %v1508 = vadd.f32 %v1437, %v1507
        %v1509 = vpop.f32.mrb[0].mxu0
        %1510 = vdwg.mxu0
        %v1511 = vrcp.pop %v642
        %v1512 = vmul.f32 %v1508, %v1511
        %v1513 = vlog2.pop %v1075
        %v1514 = vmul.f32 %v1513, 0.6931472
        %v1515 = vadd.f32 %v1512, %v1514
        %v1516 = vlog2.pop %v642
        %v1517 = vmul.f32 %v1516, 0.6931472
        %v1518 = vsub.f32 %v1515, %v1517
        %s1519 = smul.u32 %s22, 8
        %v1520 = vlaneseq
        %v1521 = vshrl.u32 %v1520, 7
        %v1522 = vstv %s1519
        %v1523 = vadd.s32 %v1522, %v1521
        %vm1524 = vcmp.lt.s32.totalorder %v1523, 16
        %v1525 = vsel %vm1524, %v1518, 0.0
        %vm1526 = vcmask 7168
        %v1527 = vsel %vm1526, %v1525, 0.0
        %1528 = vadd.xlane.f32.xlu0 %v1527
        %v1529 = vpop.xlane.xlu0 %1528
        %v1530 = vrot.slane %v1529, 4
        %v1531 = vadd.f32 %v1529, %v1530
        %v1532 = vrot.slane %v1531, 2
        %v1533 = vadd.f32 %v1531, %v1532
        %v1534 = vrot.slane %v1533, 1
        %v1535 = vadd.f32 %v1533, %v1534
        %s1536 = vtos %v1535
        %v1537 = vlaneseq
        %v1538 = vand.u32 %v1537, 127
        %vm1539 = vcmp.eq.s32.totalorder %v1521, 0
        %vm1540 = vcmp.eq.s32.totalorder %v1538, 0
        %vm1541 = vmand %vm1539, %vm1540
        %v1542 = vstv %s1536
        %v1543 = vsel %vm1541, %v1542, 0.0
        %1544 = vst [vmem:[%s195] sm:$0xff] %v1543
        %s1545 = sand.u32 %s82, 1
        %s1546 = scalar_lea.sflag [#allocation4], %s1545
        %s1547 = sand.u32 %s82, 1
        %s1548 = smul.addr %s1547, 8
        %s1549 = scalar_lea.vmem [#allocation7], %s1548
        // Predicated region
        $region37: #{tpu_custom_call.1} parent=27 // pred_check
          %p1550 = pneg %p92
        $region38: #{tpu_custom_call.1} parent=27 // pred_check_branch
          %1552 = sbr.rel (%p1550) target = $region40
        $region39: #{tpu_custom_call.1} parent=27 // pred_region
          %s1554 = ssub.s32 128, 128
          %1555 = vsyncadd %s1546, %s1554
          %s1556 = smul.addr %s22, 128
          %s1557 = scalar_lea.hbm %s2, %s1556
          %s1559 = sshll.u32 %s1549, 4
          %s1560 = int_to_ptr.vmem [resolvable:$true] %s1559
          %1562 = dma.vmem_to_hbm [thread:$0]  %s1560, 128, %s1557, %s1546
        $region40: #{tpu_custom_call.1} parent=27 // pred_fallthru
          _
      $region28: #{tpu_custom_call.1} parent=5 // pred_fallthru
        _
      %p1563 = scmp.le.s32.totalorder 2, %s17
      // Predicated region
      $region41: #{tpu_custom_call.1} parent=5 // pred_check
        %p1564 = pneg %p1563
      $region42: #{tpu_custom_call.1} parent=5 // pred_check_branch
        %1566 = sbr.rel (%p1564) target = $region44
      $region43: #{tpu_custom_call.1} parent=5 // pred_region
        %s1567 = ssub.s32 %s17, 2
        // Predicated region
        $region45: #{tpu_custom_call.1} parent=43 // pred_check
          %p1568 = pneg %p98
        $region46: #{tpu_custom_call.1} parent=43 // pred_check_branch
          %1570 = sbr.rel (%p1568) target = $region48
        $region47: #{tpu_custom_call.1} parent=43 // pred_region
          %s1571 = sand.u32 %s83, 1
          %s1572 = scalar_lea.sflag [#allocation4], %s1571
          %s1573 = sand.u32 %s83, 1
          %s1574 = smul.addr %s1573, 8
          %s1575 = scalar_lea.vmem [#allocation7], %s1574
          %1576 = dma.done %s1572, 128
        $region48: #{tpu_custom_call.1} parent=43 // pred_fallthru
          _
      $region44: #{tpu_custom_call.1} parent=5 // pred_fallthru
        _
    $region6: #{tpu_custom_call.1} parent=1 // loop_footer
      %s21 = sadd.s32 1, %s17
    $region7: #{tpu_custom_call.1} parent=1 // loop_footer_branch
      %16 = sbr.rel target = $region3
    $region8: #{tpu_custom_call.1} parent=1 // loop_exit
      _
    %1577 = vsyncpa [#allocation3], 1
    %s1578 = scalar_lea.sflag [#allocation3], 1
    %1579 = vsyncpa %s1578, 1
    %1580 = vsyncpa [#allocation6], 1
    %s1581 = scalar_lea.sflag [#allocation6], 1
    %1582 = vsyncpa %s1581, 1
    %1583 = vsyncpa [#allocation4], 1
    %s1584 = scalar_lea.sflag [#allocation4], 1
    %1585 = vsyncpa %s1584, 1

</llo_original>
